<compile_context>
chip_gen: v5e
topology: v5e:2x2
jax: 0.10.0
libtpu: 0.0.40
codegen_flags: <defaults>
</compile_context>

<pallas_src>
import functools

import jax
import jax.numpy as jnp
from jax import lax
from jax.experimental import pallas as pl
from jax.experimental.pallas import tpu as pltpu

_INV_LN2 = 1.4426950408889634
_LANES = 128

_MXU_PARAMS = pltpu.CompilerParams(
    dimension_semantics=("parallel",),          # rows grid -> both TCs on v7x
    vmem_limit_bytes=32 * 1024 * 1024,          # explicit; fits v5e/v6e/v7x scoped limits
)
_EW_PARAMS = pltpu.CompilerParams(vmem_limit_bytes=32 * 1024 * 1024)

_VMEM = pl.BlockSpec(memory_space=pltpu.MemorySpace.VMEM)
_SMEM_SCALAR = pl.BlockSpec(memory_space=pltpu.MemorySpace.SMEM)


def _round_up(v, m):
    return (v + m - 1) // m * m


# ----------------------------- Pallas kernels ------------------------------

def _conv_mm_kernel(pat_ref, w_ref, b_ref, o_ref, *, act, pre_abs):
    pat = pat_ref[...]
    if pre_abs:
        pat = jnp.abs(pat)                                   # fused |y| for hyper-analysis
    acc = jnp.dot(pat, w_ref[...], preferred_element_type=jnp.float32) + b_ref[...]
    if act == "relu":
        acc = jnp.maximum(acc, 0.0)
    o_ref[...] = acc


def _conv_mm_gdn_kernel(pat_ref, w_ref, b_ref, gamma_ref, gbeta_ref, o_ref,
                        *, act, pre_abs, inverse):
    pat = pat_ref[...]
    if pre_abs:
        pat = jnp.abs(pat)
    acc = jnp.dot(pat, w_ref[...], preferred_element_type=jnp.float32) + b_ref[...]
    if act == "relu":
        acc = jnp.maximum(acc, 0.0)
    # GDN/IGDN fused epilogue: norm pool is a second (tiny) MXU matmul, rsqrt/sqrt go to EUP.
    pool = jnp.dot(acc * acc, gamma_ref[...],
                   preferred_element_type=jnp.float32) + gbeta_ref[...]
    o_ref[...] = acc * jnp.sqrt(pool) if inverse else acc * lax.rsqrt(pool)


def _sigmoid(x):
    return 1.0 / (1.0 + jnp.exp(-x))              # exp + reciprocal route to the EUP slot


def _normal_cdf(u):
    # tanh-based approximation of the standard-normal CDF.
    # TODO(synk): switch to exact erf once erf lowering is guaranteed in Mosaic.
    return 0.5 * (1.0 + jnp.tanh(0.7978845608028654 * (u + 0.044715 * u * u * u)))


def _factorized_entropy_kernel(z_ref, noise_ref, mu_ref, s_ref, mask_ref, zt_ref, ce_ref):
    # z_tilde = z + U(-.5,.5); p = CDF(z+.5) - CDF(z-.5) (logistic); ce = sum(-log2 p)
    zt = z_ref[...] + noise_ref[...]
    zt_ref[...] = zt
    upper = _sigmoid((zt + 0.5 - mu_ref[...]) * s_ref[...])
    lower = _sigmoid((zt - 0.5 - mu_ref[...]) * s_ref[...])
    p = jnp.maximum(upper - lower, 1e-9)
    ce_ref[0, 0] = jnp.sum(-jnp.log(p) * mask_ref[...]) * _INV_LN2


def _gaussian_entropy_kernel(y_ref, noise_ref, sigma_ref, mask_ref, yt_ref, ce_ref):
    # Gaussian conditional: y_tilde = y + noise; p = Phi((y+.5)/sigma) - Phi((y-.5)/sigma)
    yt = y_ref[...] + noise_ref[...]
    yt_ref[...] = yt
    sigma = jnp.maximum(sigma_ref[...], 0.11)                 # scale lower bound
    inv_sigma = pl.reciprocal(sigma, approx=True)             # EUP, essentially free
    upper = _normal_cdf((yt + 0.5) * inv_sigma)
    lower = _normal_cdf((yt - 0.5) * inv_sigma)
    p = jnp.maximum(upper - lower, 1e-9)
    ce_ref[0, 0] = jnp.sum(-jnp.log(p) * mask_ref[...]) * _INV_LN2


def _clamp_mse_kernel(xr_ref, x_ref, mask_ref, xt_ref, sse_ref):
    # UpperBound(1.0) then LowerBound(0.0), fused with the MSE (sum-of-squares) reduction.
    xt = jnp.clip(xr_ref[...], 0.0, 1.0)
    xt_ref[...] = xt
    d = (xt - x_ref[...]) * mask_ref[...]
    sse_ref[0, 0] = jnp.sum(d * d)


# ----------------------------- matmul wrapper --------------------------------

def fused_matmul(pat, wmat, bias, *, act="none", pre_abs=False, gdn=None, tm=256):
    """(M,K)@(K,Nout)+b with optional fused |.|, ReLU and GDN/IGDN epilogue.

    MXU operands are bf16 (f32 accumulation); epilogue math stays f32.  Rows are tiled on a
    1-D "parallel" grid so the kernel is resolution independent.
    TODO(synk): tile K (and pad Cout to 128/256 lanes) for production channel counts.
    """
    M, K = pat.shape
    Nout = wmat.shape[1]
    Mp = _round_up(M, 8)
    tm_eff = Mp if Mp <= tm else tm
    Mp = _round_up(Mp, tm_eff)
    if Mp != M:
        pat = jnp.pad(pat, ((0, Mp - M), (0, 0)))
    pat = pat.astype(jnp.bfloat16)
    wmat = wmat.astype(jnp.bfloat16)
    bias = bias.reshape(1, Nout).astype(jnp.float32)

    in_specs = [
        pl.BlockSpec((tm_eff, K), lambda i: (i, 0)),
        pl.BlockSpec((K, Nout), lambda i: (0, 0)),
        pl.BlockSpec((1, Nout), lambda i: (0, 0)),
    ]
    operands = [pat, wmat, bias]
    if gdn is None:
        kernel = functools.partial(_conv_mm_kernel, act=act, pre_abs=pre_abs)
    else:
        mode, gamma, gbeta = gdn
        in_specs += [
            pl.BlockSpec((Nout, Nout), lambda i: (0, 0)),
            pl.BlockSpec((1, Nout), lambda i: (0, 0)),
        ]
        operands += [gamma.astype(jnp.float32),
                     gbeta.reshape(1, Nout).astype(jnp.float32)]
        kernel = functools.partial(_conv_mm_gdn_kernel, act=act, pre_abs=pre_abs,
                                   inverse=(mode == "igdn"))

    out = pl.pallas_call(
        kernel,
        grid=(Mp // tm_eff,),
        in_specs=in_specs,
        out_specs=pl.BlockSpec((tm_eff, Nout), lambda i: (i, 0)),
        out_shape=jax.ShapeDtypeStruct((Mp, Nout), jnp.float32),
        compiler_params=_MXU_PARAMS,
    )(*operands)
    return out[:M] if Mp != M else out


# ----------------------------- conv / deconv glue ----------------------------

def _im2col_nhwc(x, kh, kw, stride, padding):
    # TODO(synk): for production resolutions, generate the patch tile inside the Pallas
    # kernel (shifted-matmul accumulation over kh*kw taps) instead of materializing it.
    N, H, W, C = x.shape
    xp = jnp.pad(x, ((0, 0), (padding, padding), (padding, padding), (0, 0)))
    Ho = (H + 2 * padding - kh) // stride + 1
    Wo = (W + 2 * padding - kw) // stride + 1
    cols = []
    for i in range(kh):
        for j in range(kw):
            cols.append(xp[:, i:i + stride * Ho:stride, j:j + stride * Wo:stride, :])
    pat = jnp.concatenate(cols, axis=-1)                    # [N, Ho, Wo, kh*kw*C]
    return pat.reshape(N * Ho * Wo, kh * kw * C), Ho, Wo


def conv2d(x, w, b, *, stride, padding, act="none", pre_abs=False, gdn=None):
    # x: [N,H,W,Cin] channels-last; w: [Cout,Cin,kh,kw] (PyTorch layout)
    N = x.shape[0]
    Cout, Cin, kh, kw = w.shape
    pat, Ho, Wo = _im2col_nhwc(x, kh, kw, stride, padding)
    wm = w.transpose(2, 3, 1, 0).reshape(kh * kw * Cin, Cout)
    out = fused_matmul(pat, wm, b, act=act, pre_abs=pre_abs, gdn=gdn)
    return out.reshape(N, Ho, Wo, Cout)


def _deconv_phase_weight(w):
    """ConvTranspose2d(k=5,s=2,p=2,op=1) -> sub-pixel phase kernels packed along 4*Cout.

    w: [Cin, Cout, 5, 5] (PyTorch ConvTranspose2d layout).  Returns the (3*3*Cin, 4*Cout)
    matmul weight for a stride-1 3x3 conv at INPUT resolution whose 4*Cout outputs are the
    2x2 output phases (avoids feeding 75%-zero rows to the MXU).
    """
    Cin, Cout = w.shape[0], w.shape[1]
    w_eq = jnp.flip(w, axis=(2, 3)).transpose(1, 0, 2, 3)    # [Cout, Cin, 5, 5]
    wc = jnp.zeros((3, 3, Cin, 4 * Cout), jnp.float32)
    for ph in (0, 1):
        for pw_ in (0, 1):
            pidx = ph * 2 + pw_
            for wi in range(3):
                a = 2 * wi - ph
                if a < 0 or a > 4:
                    continue
                for wj in range(3):
                    b = 2 * wj - pw_
                    if b < 0 or b > 4:
                        continue
                    wc = wc.at[wi, wj, :, pidx * Cout:(pidx + 1) * Cout].set(
                        w_eq[:, :, a, b].T)
    return wc.reshape(9 * Cin, 4 * Cout)


def _blockdiag4(g):
    C = g.shape[0]
    out = jnp.zeros((4 * C, 4 * C), g.dtype)
    for p in range(4):
        out = out.at[p * C:(p + 1) * C, p * C:(p + 1) * C].set(g)
    return out


def deconv2d(x, w, b, *, act="none", gdn=None):
    """Sub-pixel transposed conv: one stride-1 3x3 phase matmul + spatial interleave.
    ReLU / IGDN fuse into the matmul epilogue (block-diagonal gamma keeps the norm pool
    per output pixel)."""
    N, H, W, Cin = x.shape
    Cout = w.shape[1]
    wc = _deconv_phase_weight(w)
    bc = jnp.tile(b, 4)
    if gdn is not None:
        mode, gamma, gbeta = gdn
        gdn = (mode, _blockdiag4(gamma), jnp.tile(gbeta, 4))
    pat, _, _ = _im2col_nhwc(x, 3, 3, 1, 1)
    out = fused_matmul(pat, wc, bc, act=act, gdn=gdn)         # (N*H*W, 4*Cout)
    out = out.reshape(N, H, W, 2, 2, Cout).transpose(0, 1, 3, 2, 4, 5)
    return out.reshape(N, 2 * H, 2 * W, Cout)


# ----------------------------- elementwise / reduction glue ------------------

def _flatten_lane_pad(t):
    flat = t.reshape(-1)
    total = flat.shape[0]
    rows = _round_up(pl.cdiv(total, _LANES), 8)
    pad = rows * _LANES - total
    if pad:
        flat = jnp.pad(flat, (0, pad))
    return flat.reshape(rows, _LANES), total


def _padded_mask(total, rows):
    return jnp.zeros((rows * _LANES,), jnp.float32).at[:total].set(1.0).reshape(rows, _LANES)


def _elementwise_reduce_call(kernel, tensors, orig_shape):
    """Run a fused elementwise + scalar-reduction kernel on lane-dense (rows,128) slabs.
    The scalar reduction is written straight to a (1,1) SMEM output.

    TODO(synk): tile over a grid with a pl.when init/finalize accumulator once production
    resolutions no longer fit a single VMEM block.
    """
    flats, total = [], None
    for t in tensors:
        f2d, total = _flatten_lane_pad(t)
        flats.append(f2d)
    rows = flats[0].shape[0]
    mask = _padded_mask(total, rows)
    out2d, scalar = pl.pallas_call(
        kernel,
        in_specs=[_VMEM] * (len(flats) + 1),
        out_specs=(_VMEM, _SMEM_SCALAR),
        out_shape=(jax.ShapeDtypeStruct((rows, _LANES), jnp.float32),
                   jax.ShapeDtypeStruct((1, 1), jnp.float32)),
        compiler_params=_EW_PARAMS,
    )(*flats, mask)
    out = out2d.reshape(-1)[:total].reshape(orig_shape)
    return out, scalar[0, 0]


def factorized_entropy(z, noise, mu, s):
    mu_full = jnp.broadcast_to(mu.reshape(1, 1, 1, -1), z.shape)
    s_full = jnp.broadcast_to(s.reshape(1, 1, 1, -1), z.shape)
    return _elementwise_reduce_call(_factorized_entropy_kernel,
                                    [z, noise, mu_full, s_full], z.shape)


def gaussian_conditional(y, noise, sigma):
    return _elementwise_reduce_call(_gaussian_entropy_kernel, [y, noise, sigma], y.shape)


def clamp_and_mse(x_tilde_raw, x):
    xt, sse = _elementwise_reduce_call(_clamp_mse_kernel, [x_tilde_raw, x], x.shape)
    return xt, sse / x.size


# ----------------------------- parameters -----------------------------------

def init_params(key, c_in=3, n_filters=8, latent_c=8, hyper_c=4):
    ks = jax.random.split(key, 8)
    w = lambda k, shape: (0.1 * jax.random.normal(k, shape)).astype(jnp.float32)
    p = {}
    # AnalysisTransform: conv5x5/s2 + GDN, conv5x5/s2
    p["a_w0"] = w(ks[0], (n_filters, c_in, 5, 5)); p["a_b0"] = jnp.zeros((n_filters,), jnp.float32)
    p["a_gamma0"] = 0.1 * jnp.eye(n_filters, dtype=jnp.float32)
    p["a_beta0"] = jnp.ones((n_filters,), jnp.float32)
    p["a_w1"] = w(ks[1], (latent_c, n_filters, 5, 5)); p["a_b1"] = jnp.zeros((latent_c,), jnp.float32)
    # HyperpriorAnalysisTransform: conv3x3/s1 + ReLU, conv5x5/s2
    p["ha_w0"] = w(ks[2], (hyper_c, latent_c, 3, 3)); p["ha_b0"] = jnp.zeros((hyper_c,), jnp.float32)
    p["ha_w1"] = w(ks[3], (hyper_c, hyper_c, 5, 5)); p["ha_b1"] = jnp.zeros((hyper_c,), jnp.float32)
    # Factorized EntropyModel parameters (per hyper-latent channel)
    p["em_mu"] = jnp.zeros((hyper_c,), jnp.float32)
    p["em_s"] = jnp.ones((hyper_c,), jnp.float32)
    # HyperpriorSynthesisTransform: deconv5x5/s2 + ReLU, conv3x3/s1 -> sigma
    p["hs_w0"] = w(ks[4], (hyper_c, latent_c, 5, 5)); p["hs_b0"] = jnp.zeros((latent_c,), jnp.float32)
    p["hs_w1"] = w(ks[5], (latent_c, latent_c, 3, 3)); p["hs_b1"] = 0.5 * jnp.ones((latent_c,), jnp.float32)
    # SynthesisTransform: deconv5x5/s2 + IGDN, deconv5x5/s2
    p["s_w0"] = w(ks[6], (latent_c, n_filters, 5, 5)); p["s_b0"] = jnp.zeros((n_filters,), jnp.float32)
    p["s_gamma0"] = 0.1 * jnp.eye(n_filters, dtype=jnp.float32)
    p["s_beta0"] = jnp.ones((n_filters,), jnp.float32)
    p["s_w1"] = w(ks[7], (n_filters, c_in, 5, 5)); p["s_b1"] = 0.5 * jnp.ones((c_in,), jnp.float32)
    return p


# ----------------------------- forward pass ----------------------------------

def compressor2018_forward(params, x, noise_z, noise_y, distortion_weight=1.0):
    N, C, H, W = x.shape
    num_pixels = N * H * W
    xh = x.transpose(0, 2, 3, 1)                              # NHWC once; pipeline stays channels-last

    # analysis transform (GDN fused into the conv matmul epilogue)
    h = conv2d(xh, params["a_w0"], params["a_b0"], stride=2, padding=2,
               gdn=("gdn", params["a_gamma0"], params["a_beta0"]))
    y = conv2d(h, params["a_w1"], params["a_b1"], stride=2, padding=2)

    # hyperprior analysis on |y| (abs + ReLU fused into the conv kernel)
    h = conv2d(y, params["ha_w0"], params["ha_b0"], stride=1, padding=1,
               act="relu", pre_abs=True)
    z = conv2d(h, params["ha_w1"], params["ha_b1"], stride=2, padding=2)

    # factorized entropy model: z_tilde, z cross-entropy (bits)
    z_tilde, z_ce_loss = factorized_entropy(z, noise_z.transpose(0, 2, 3, 1),
                                            params["em_mu"], params["em_s"])

    # hyperprior synthesis -> sigma (sub-pixel deconv + fused ReLU, conv3x3)
    h = deconv2d(z_tilde, params["hs_w0"], params["hs_b0"], act="relu")
    sigma = conv2d(h, params["hs_w1"], params["hs_b1"], stride=1, padding=1)

    # conditional (Gaussian) model on y
    y_tilde, y_ce_loss = gaussian_conditional(y, noise_y.transpose(0, 2, 3, 1), sigma)

    # synthesis transform (sub-pixel deconv + fused IGDN, sub-pixel deconv)
    h = deconv2d(y_tilde, params["s_w0"], params["s_b0"],
                 gdn=("igdn", params["s_gamma0"], params["s_beta0"]))
    x_tilde_raw = deconv2d(h, params["s_w1"], params["s_b1"])

    # UpperBound(1.0) / LowerBound(0.0) + MSE distortion, fused in one kernel
    x_tilde_h, mse = clamp_and_mse(x_tilde_raw, xh)
    x_tilde = x_tilde_h.transpose(0, 3, 1, 2)                 # back to NCHW for the caller

    total_distortion = mse
    entropy_loss = (z_ce_loss + y_ce_loss) / num_pixels
    total_loss = distortion_weight * total_distortion + entropy_loss
    losses = {
        "z_entropy": z_ce_loss / num_pixels,
        "y_entropy": y_ce_loss / num_pixels,
        "bpp": entropy_loss,
        "mse": mse,
        "total_loss": total_loss,
    }
    return x_tilde, losses


if __name__ == "__main__":
    key = jax.random.PRNGKey(0)
    k_x, k_p, k_nz, k_ny = jax.random.split(key, 4)
    N, C, H, W = 2, 3, 16, 16
    latent_c, hyper_c = 8, 4

    x = jax.random.uniform(k_x, (N, C, H, W), dtype=jnp.float32)
    params = init_params(k_p, c_in=C, n_filters=8, latent_c=latent_c, hyper_c=hyper_c)
    # training-mode additive uniform noise U(-0.5, 0.5), deterministic keys
    noise_z = jax.random.uniform(k_nz, (N, hyper_c, H // 8, W // 8), jnp.float32, -0.5, 0.5)
    noise_y = jax.random.uniform(k_ny, (N, latent_c, H // 4, W // 4), jnp.float32, -0.5, 0.5)

    fwd = jax.jit(compressor2018_forward)
    x_tilde, losses = fwd(params, x, noise_z, noise_y)
    jax.block_until_ready((x_tilde, losses))
    assert x_tilde.shape == x.shape
    assert all(jnp.isfinite(v) for v in losses.values())
    print("KERNEL_OK")
</pallas_src>

<mosaic_0001>
module attributes {stable_mosaic.version = 11 : i64} {
  func.func @_conv_mm_gdn_kernel(%arg0: i32, %arg1: memref<128x75xbf16, #tpu.memory_space<vmem>>, %arg2: memref<75x8xbf16, #tpu.memory_space<vmem>>, %arg3: memref<1x8xf32, #tpu.memory_space<vmem>>, %arg4: memref<8x8xf32, #tpu.memory_space<vmem>>, %arg5: memref<1x8xf32, #tpu.memory_space<vmem>>, %arg6: memref<128x8xf32, #tpu.memory_space<vmem>>) attributes {dimension_semantics = [#tpu.dimension_semantics<parallel>], iteration_bounds = array<i64: 1>, scalar_prefetch = 0 : i64, scratch_operands = 0 : i64, tpu.core_type = #tpu.core_type<tc>, window_params = [{transform_indices = @transform_0, window_bounds = array<i64: 128, 75>}, {pipeline_mode = #tpu.pipeline_mode<synchronous>, transform_indices = @transform_1, window_bounds = array<i64: 75, 8>}, {pipeline_mode = #tpu.pipeline_mode<synchronous>, transform_indices = @transform_2, window_bounds = array<i64: 1, 8>}, {pipeline_mode = #tpu.pipeline_mode<synchronous>, transform_indices = @transform_3, window_bounds = array<i64: 8, 8>}, {pipeline_mode = #tpu.pipeline_mode<synchronous>, transform_indices = @transform_4, window_bounds = array<i64: 1, 8>}, {transform_indices = @transform_5, window_bounds = array<i64: 128, 8>}]} {
    %c0 = arith.constant 0 : index
    %c0_0 = arith.constant 0 : index
    %0 = vector.load %arg1[%c0, %c0_0] : memref<128x75xbf16, #tpu.memory_space<vmem>>, vector<128x75xbf16>
    %c0_1 = arith.constant 0 : index
    %c0_2 = arith.constant 0 : index
    %1 = vector.load %arg2[%c0_1, %c0_2] : memref<75x8xbf16, #tpu.memory_space<vmem>>, vector<75x8xbf16>
    %cst = arith.constant dense<0.000000e+00> : vector<128x8xf32>
    %2 = tpu.matmul %0, %1, %cst {dimension_numbers = #tpu.dot_dimension_numbers<[1], [0], [0], [1], [0, 0, 1, 1], [], []>} : vector<128x75xbf16>, vector<75x8xbf16>, vector<128x8xf32> -> vector<128x8xf32>
    %c0_3 = arith.constant 0 : index
    %c0_4 = arith.constant 0 : index
    %3 = vector.load %arg3[%c0_3, %c0_4] : memref<1x8xf32, #tpu.memory_space<vmem>>, vector<1x8xf32>
    %4 = vector.broadcast %3 : vector<1x8xf32> to vector<128x8xf32>
    %5 = arith.addf %2, %4 : vector<128x8xf32>
    %6 = arith.mulf %5, %5 : vector<128x8xf32>
    %c0_5 = arith.constant 0 : index
    %c0_6 = arith.constant 0 : index
    %7 = vector.load %arg4[%c0_5, %c0_6] : memref<8x8xf32, #tpu.memory_space<vmem>>, vector<8x8xf32>
    %cst_7 = arith.constant dense<0.000000e+00> : vector<128x8xf32>
    %8 = tpu.matmul %6, %7, %cst_7 {dimension_numbers = #tpu.dot_dimension_numbers<[1], [0], [0], [1], [0, 0, 1, 1], [], []>} : vector<128x8xf32>, vector<8x8xf32>, vector<128x8xf32> -> vector<128x8xf32>
    %c0_8 = arith.constant 0 : index
    %c0_9 = arith.constant 0 : index
    %9 = vector.load %arg5[%c0_8, %c0_9] : memref<1x8xf32, #tpu.memory_space<vmem>>, vector<1x8xf32>
    %10 = vector.broadcast %9 : vector<1x8xf32> to vector<128x8xf32>
    %11 = arith.addf %8, %10 : vector<128x8xf32>
    %12 = math.rsqrt %11 : vector<128x8xf32>
    %13 = arith.mulf %5, %12 : vector<128x8xf32>
    %c0_10 = arith.constant 0 : index
    %c0_11 = arith.constant 0 : index
    %14 = vector.load %arg6[%c0_10, %c0_11] : memref<128x8xf32, #tpu.memory_space<vmem>>, vector<128x8xf32>
    tpu.vector_store %arg6[%c0_10, %c0_11], %13 {strides = array<i32>} : memref<128x8xf32, #tpu.memory_space<vmem>>, vector<128x8xf32>,
    return
  }
  func.func @transform_0(%arg0: i32) -> (i32, i32) {
    %c0_i32 = arith.constant 0 : i32
    %c0_i32_0 = arith.constant 0 : i32
    return %arg0, %c0_i32 : i32, i32
  }
  func.func @transform_1(%arg0: i32) -> (i32, i32) {
    %c0_i32 = arith.constant 0 : i32
    %c0_i32_0 = arith.constant 0 : i32
    %c0_i32_1 = arith.constant 0 : i32
    return %c0_i32, %c0_i32_0 : i32, i32
  }
  func.func @transform_2(%arg0: i32) -> (i32, i32) {
    %c0_i32 = arith.constant 0 : i32
    %c0_i32_0 = arith.constant 0 : i32
    %c0_i32_1 = arith.constant 0 : i32
    return %c0_i32, %c0_i32_0 : i32, i32
  }
  func.func @transform_3(%arg0: i32) -> (i32, i32) {
    %c0_i32 = arith.constant 0 : i32
    %c0_i32_0 = arith.constant 0 : i32
    %c0_i32_1 = arith.constant 0 : i32
    return %c0_i32, %c0_i32_0 : i32, i32
  }
  func.func @transform_4(%arg0: i32) -> (i32, i32) {
    %c0_i32 = arith.constant 0 : i32
    %c0_i32_0 = arith.constant 0 : i32
    %c0_i32_1 = arith.constant 0 : i32
    return %c0_i32, %c0_i32_0 : i32, i32
  }
  func.func @transform_5(%arg0: i32) -> (i32, i32) {
    %c0_i32 = arith.constant 0 : i32
    %c0_i32_0 = arith.constant 0 : i32
    return %arg0, %c0_i32 : i32, i32
  }
}

module attributes {stable_mosaic.version = 11 : i64} {
  func.func @_conv_mm_kernel(%arg0: i32, %arg1: memref<32x200xbf16, #tpu.memory_space<vmem>>, %arg2: memref<200x8xbf16, #tpu.memory_space<vmem>>, %arg3: memref<1x8xf32, #tpu.memory_space<vmem>>, %arg4: memref<32x8xf32, #tpu.memory_space<vmem>>) attributes {dimension_semantics = [#tpu.dimension_semantics<parallel>], iteration_bounds = array<i64: 1>, scalar_prefetch = 0 : i64, scratch_operands = 0 : i64, tpu.core_type = #tpu.core_type<tc>, window_params = [{transform_indices = @transform_0, window_bounds = array<i64: 32, 200>}, {pipeline_mode = #tpu.pipeline_mode<synchronous>, transform_indices = @transform_1, window_bounds = array<i64: 200, 8>}, {pipeline_mode = #tpu.pipeline_mode<synchronous>, transform_indices = @transform_2, window_bounds = array<i64: 1, 8>}, {transform_indices = @transform_3, window_bounds = array<i64: 32, 8>}]} {
    %c0 = arith.constant 0 : index
    %c0_0 = arith.constant 0 : index
    %0 = vector.load %arg1[%c0, %c0_0] : memref<32x200xbf16, #tpu.memory_space<vmem>>, vector<32x200xbf16>
    %c0_1 = arith.constant 0 : index
    %c0_2 = arith.constant 0 : index
    %1 = vector.load %arg2[%c0_1, %c0_2] : memref<200x8xbf16, #tpu.memory_space<vmem>>, vector<200x8xbf16>
    %cst = arith.constant dense<0.000000e+00> : vector<32x8xf32>
    %2 = tpu.matmul %0, %1, %cst {dimension_numbers = #tpu.dot_dimension_numbers<[1], [0], [0], [1], [0, 0, 1, 1], [], []>} : vector<32x200xbf16>, vector<200x8xbf16>, vector<32x8xf32> -> vector<32x8xf32>
    %c0_3 = arith.constant 0 : index
    %c0_4 = arith.constant 0 : index
    %3 = vector.load %arg3[%c0_3, %c0_4] : memref<1x8xf32, #tpu.memory_space<vmem>>, vector<1x8xf32>
    %4 = vector.broadcast %3 : vector<1x8xf32> to vector<32x8xf32>
    %5 = arith.addf %2, %4 : vector<32x8xf32>
    %c0_5 = arith.constant 0 : index
    %c0_6 = arith.constant 0 : index
    %6 = vector.load %arg4[%c0_5, %c0_6] : memref<32x8xf32, #tpu.memory_space<vmem>>, vector<32x8xf32>
    tpu.vector_store %arg4[%c0_5, %c0_6], %5 {strides = array<i32>} : memref<32x8xf32, #tpu.memory_space<vmem>>, vector<32x8xf32>,
    return
  }
  func.func @transform_0(%arg0: i32) -> (i32, i32) {
    %c0_i32 = arith.constant 0 : i32
    %c0_i32_0 = arith.constant 0 : i32
    return %arg0, %c0_i32 : i32, i32
  }
  func.func @transform_1(%arg0: i32) -> (i32, i32) {
    %c0_i32 = arith.constant 0 : i32
    %c0_i32_0 = arith.constant 0 : i32
    %c0_i32_1 = arith.constant 0 : i32
    return %c0_i32, %c0_i32_0 : i32, i32
  }
  func.func @transform_2(%arg0: i32) -> (i32, i32) {
    %c0_i32 = arith.constant 0 : i32
    %c0_i32_0 = arith.constant 0 : i32
    %c0_i32_1 = arith.constant 0 : i32
    return %c0_i32, %c0_i32_0 : i32, i32
  }
  func.func @transform_3(%arg0: i32) -> (i32, i32) {
    %c0_i32 = arith.constant 0 : i32
    %c0_i32_0 = arith.constant 0 : i32
    return %arg0, %c0_i32 : i32, i32
  }
}

module attributes {stable_mosaic.version = 11 : i64} {
  func.func @_conv_mm_kernel(%arg0: i32, %arg1: memref<32x72xbf16, #tpu.memory_space<vmem>>, %arg2: memref<72x4xbf16, #tpu.memory_space<vmem>>, %arg3: memref<1x4xf32, #tpu.memory_space<vmem>>, %arg4: memref<32x4xf32, #tpu.memory_space<vmem>>) attributes {dimension_semantics = [#tpu.dimension_semantics<parallel>], iteration_bounds = array<i64: 1>, scalar_prefetch = 0 : i64, scratch_operands = 0 : i64, tpu.core_type = #tpu.core_type<tc>, window_params = [{transform_indices = @transform_0, window_bounds = array<i64: 32, 72>}, {pipeline_mode = #tpu.pipeline_mode<synchronous>, transform_indices = @transform_1, window_bounds = array<i64: 72, 4>}, {pipeline_mode = #tpu.pipeline_mode<synchronous>, transform_indices = @transform_2, window_bounds = array<i64: 1, 4>}, {transform_indices = @transform_3, window_bounds = array<i64: 32, 4>}]} {
    %c0 = arith.constant 0 : index
    %c0_0 = arith.constant 0 : index
    %0 = vector.load %arg1[%c0, %c0_0] : memref<32x72xbf16, #tpu.memory_space<vmem>>, vector<32x72xbf16>
    %1 = math.absf %0 : vector<32x72xbf16>
    %c0_1 = arith.constant 0 : index
    %c0_2 = arith.constant 0 : index
    %2 = vector.load %arg2[%c0_1, %c0_2] : memref<72x4xbf16, #tpu.memory_space<vmem>>, vector<72x4xbf16>
    %cst = arith.constant dense<0.000000e+00> : vector<32x4xf32>
    %3 = tpu.matmul %1, %2, %cst {dimension_numbers = #tpu.dot_dimension_numbers<[1], [0], [0], [1], [0, 0, 1, 1], [], []>} : vector<32x72xbf16>, vector<72x4xbf16>, vector<32x4xf32> -> vector<32x4xf32>
    %c0_3 = arith.constant 0 : index
    %c0_4 = arith.constant 0 : index
    %4 = vector.load %arg3[%c0_3, %c0_4] : memref<1x4xf32, #tpu.memory_space<vmem>>, vector<1x4xf32>
    %5 = vector.broadcast %4 : vector<1x4xf32> to vector<32x4xf32>
    %6 = arith.addf %3, %5 : vector<32x4xf32>
    %cst_5 = arith.constant 0.000000e+00 : f32
    %7 = vector.broadcast %cst_5 : f32 to vector<32x4xf32>
    %8 = arith.maximumf %6, %7 : vector<32x4xf32>
    %c0_6 = arith.constant 0 : index
    %c0_7 = arith.constant 0 : index
    %9 = vector.load %arg4[%c0_6, %c0_7] : memref<32x4xf32, #tpu.memory_space<vmem>>, vector<32x4xf32>
    tpu.vector_store %arg4[%c0_6, %c0_7], %8 {strides = array<i32>} : memref<32x4xf32, #tpu.memory_space<vmem>>, vector<32x4xf32>,
    return
  }
  func.func @transform_0(%arg0: i32) -> (i32, i32) {
    %c0_i32 = arith.constant 0 : i32
    %c0_i32_0 = arith.constant 0 : i32
    return %arg0, %c0_i32 : i32, i32
  }
  func.func @transform_1(%arg0: i32) -> (i32, i32) {
    %c0_i32 = arith.constant 0 : i32
    %c0_i32_0 = arith.constant 0 : i32
    %c0_i32_1 = arith.constant 0 : i32
    return %c0_i32, %c0_i32_0 : i32, i32
  }
  func.func @transform_2(%arg0: i32) -> (i32, i32) {
    %c0_i32 = arith.constant 0 : i32
    %c0_i32_0 = arith.constant 0 : i32
    %c0_i32_1 = arith.constant 0 : i32
    return %c0_i32, %c0_i32_0 : i32, i32
  }
  func.func @transform_3(%arg0: i32) -> (i32, i32) {
    %c0_i32 = arith.constant 0 : i32
    %c0_i32_0 = arith.constant 0 : i32
    return %arg0, %c0_i32 : i32, i32
  }
}

module attributes {stable_mosaic.version = 11 : i64} {
  func.func @_factorized_entropy_kernel(%arg0: memref<8x128xf32, #tpu.memory_space<vmem>>, %arg1: memref<8x128xf32, #tpu.memory_space<vmem>>, %arg2: memref<8x128xf32, #tpu.memory_space<vmem>>, %arg3: memref<8x128xf32, #tpu.memory_space<vmem>>, %arg4: memref<8x128xf32, #tpu.memory_space<vmem>>, %arg5: memref<8x128xf32, #tpu.memory_space<vmem>>, %arg6: memref<1x1xf32, #tpu.memory_space<smem>>) attributes {dimension_semantics = [], scalar_prefetch = 0 : i64, scratch_operands = 0 : i64, tpu.core_type = #tpu.core_type<tc>} {
    %c0 = arith.constant 0 : index
    %c0_0 = arith.constant 0 : index
    %0 = vector.load %arg0[%c0, %c0_0] : memref<8x128xf32, #tpu.memory_space<vmem>>, vector<8x128xf32>
    %c0_1 = arith.constant 0 : index
    %c0_2 = arith.constant 0 : index
    %1 = vector.load %arg1[%c0_1, %c0_2] : memref<8x128xf32, #tpu.memory_space<vmem>>, vector<8x128xf32>
    %2 = arith.addf %0, %1 : vector<8x128xf32>
    %c0_3 = arith.constant 0 : index
    %c0_4 = arith.constant 0 : index
    %3 = vector.load %arg5[%c0_3, %c0_4] : memref<8x128xf32, #tpu.memory_space<vmem>>, vector<8x128xf32>
    tpu.vector_store %arg5[%c0_3, %c0_4], %2 {strides = array<i32>} : memref<8x128xf32, #tpu.memory_space<vmem>>, vector<8x128xf32>,
    %cst = arith.constant 5.000000e-01 : f32
    %4 = vector.broadcast %cst : f32 to vector<8x128xf32>
    %5 = arith.addf %2, %4 : vector<8x128xf32>
    %c0_5 = arith.constant 0 : index
    %c0_6 = arith.constant 0 : index
    %6 = vector.load %arg2[%c0_5, %c0_6] : memref<8x128xf32, #tpu.memory_space<vmem>>, vector<8x128xf32>
    %7 = arith.subf %5, %6 : vector<8x128xf32>
    %c0_7 = arith.constant 0 : index
    %c0_8 = arith.constant 0 : index
    %8 = vector.load %arg3[%c0_7, %c0_8] : memref<8x128xf32, #tpu.memory_space<vmem>>, vector<8x128xf32>
    %9 = arith.mulf %7, %8 : vector<8x128xf32>
    %cst_9 = arith.constant 0.000000e+00 : f32
    %10 = vector.broadcast %cst_9 : f32 to vector<8x128xf32>
    %11 = arith.subf %10, %9 : vector<8x128xf32>
    %12 = math.exp %11 : vector<8x128xf32>
    %cst_10 = arith.constant 1.000000e+00 : f32
    %13 = vector.broadcast %cst_10 : f32 to vector<8x128xf32>
    %14 = arith.addf %13, %12 : vector<8x128xf32>
    %cst_11 = arith.constant 1.000000e+00 : f32
    %15 = vector.broadcast %cst_11 : f32 to vector<8x128xf32>
    %16 = arith.divf %15, %14 : vector<8x128xf32>
    %cst_12 = arith.constant 5.000000e-01 : f32
    %17 = vector.broadcast %cst_12 : f32 to vector<8x128xf32>
    %18 = arith.subf %2, %17 : vector<8x128xf32>
    %c0_13 = arith.constant 0 : index
    %c0_14 = arith.constant 0 : index
    %19 = vector.load %arg2[%c0_13, %c0_14] : memref<8x128xf32, #tpu.memory_space<vmem>>, vector<8x128xf32>
    %20 = arith.subf %18, %19 : vector<8x128xf32>
    %c0_15 = arith.constant 0 : index
    %c0_16 = arith.constant 0 : index
    %21 = vector.load %arg3[%c0_15, %c0_16] : memref<8x128xf32, #tpu.memory_space<vmem>>, vector<8x128xf32>
    %22 = arith.mulf %20, %21 : vector<8x128xf32>
    %cst_17 = arith.constant 0.000000e+00 : f32
    %23 = vector.broadcast %cst_17 : f32 to vector<8x128xf32>
    %24 = arith.subf %23, %22 : vector<8x128xf32>
    %25 = math.exp %24 : vector<8x128xf32>
    %cst_18 = arith.constant 1.000000e+00 : f32
    %26 = vector.broadcast %cst_18 : f32 to vector<8x128xf32>
    %27 = arith.addf %26, %25 : vector<8x128xf32>
    %cst_19 = arith.constant 1.000000e+00 : f32
    %28 = vector.broadcast %cst_19 : f32 to vector<8x128xf32>
    %29 = arith.divf %28, %27 : vector<8x128xf32>
    %30 = arith.subf %16, %29 : vector<8x128xf32>
    %cst_20 = arith.constant 9.99999971E-10 : f32
    %31 = vector.broadcast %cst_20 : f32 to vector<8x128xf32>
    %32 = arith.maximumf %30, %31 : vector<8x128xf32>
    %33 = math.log %32 : vector<8x128xf32>
    %cst_21 = arith.constant 0.000000e+00 : f32
    %34 = vector.broadcast %cst_21 : f32 to vector<8x128xf32>
    %35 = arith.subf %34, %33 : vector<8x128xf32>
    %c0_22 = arith.constant 0 : index
    %c0_23 = arith.constant 0 : index
    %36 = vector.load %arg4[%c0_22, %c0_23] : memref<8x128xf32, #tpu.memory_space<vmem>>, vector<8x128xf32>
    %37 = arith.mulf %35, %36 : vector<8x128xf32>
    %38 = vector.shape_cast %37 : vector<8x128xf32> to vector<1x8x128xf32>
    %cst_24 = arith.constant dense<0.000000e+00> : vector<1xf32>
    %39 = vector.multi_reduction <add>, %38, %cst_24 [1, 2] : vector<1x8x128xf32> to vector<1xf32>
    %40 = vector.shape_cast %39 : vector<1xf32> to vector<1x1x1xf32>
    %41 = vector.extract %40[0, 0, 0] : f32 from vector<1x1x1xf32>
    %cst_25 = arith.constant 1.44269502 : f32
    %42 = arith.mulf %41, %cst_25 : f32
    %c0_26 = arith.constant 0 : index
    %c0_27 = arith.constant 0 : index
    %43 = memref.load %arg6[%c0_26, %c0_27] : memref<1x1xf32, #tpu.memory_space<smem>>
    memref.store %42, %arg6[%c0_26, %c0_27] : memref<1x1xf32, #tpu.memory_space<smem>>
    return
  }
}

module attributes {stable_mosaic.version = 11 : i64} {
  func.func @_conv_mm_kernel(%arg0: i32, %arg1: memref<8x100xbf16, #tpu.memory_space<vmem>>, %arg2: memref<100x4xbf16, #tpu.memory_space<vmem>>, %arg3: memref<1x4xf32, #tpu.memory_space<vmem>>, %arg4: memref<8x4xf32, #tpu.memory_space<vmem>>) attributes {dimension_semantics = [#tpu.dimension_semantics<parallel>], iteration_bounds = array<i64: 1>, scalar_prefetch = 0 : i64, scratch_operands = 0 : i64, tpu.core_type = #tpu.core_type<tc>, window_params = [{transform_indices = @transform_0, window_bounds = array<i64: 8, 100>}, {pipeline_mode = #tpu.pipeline_mode<synchronous>, transform_indices = @transform_1, window_bounds = array<i64: 100, 4>}, {pipeline_mode = #tpu.pipeline_mode<synchronous>, transform_indices = @transform_2, window_bounds = array<i64: 1, 4>}, {transform_indices = @transform_3, window_bounds = array<i64: 8, 4>}]} {
    %c0 = arith.constant 0 : index
    %c0_0 = arith.constant 0 : index
    %0 = vector.load %arg1[%c0, %c0_0] : memref<8x100xbf16, #tpu.memory_space<vmem>>, vector<8x100xbf16>
    %c0_1 = arith.constant 0 : index
    %c0_2 = arith.constant 0 : index
    %1 = vector.load %arg2[%c0_1, %c0_2] : memref<100x4xbf16, #tpu.memory_space<vmem>>, vector<100x4xbf16>
    %cst = arith.constant dense<0.000000e+00> : vector<8x4xf32>
    %2 = tpu.matmul %0, %1, %cst {dimension_numbers = #tpu.dot_dimension_numbers<[1], [0], [0], [1], [0, 0, 1, 1], [], []>} : vector<8x100xbf16>, vector<100x4xbf16>, vector<8x4xf32> -> vector<8x4xf32>
    %c0_3 = arith.constant 0 : index
    %c0_4 = arith.constant 0 : index
    %3 = vector.load %arg3[%c0_3, %c0_4] : memref<1x4xf32, #tpu.memory_space<vmem>>, vector<1x4xf32>
    %4 = vector.broadcast %3 : vector<1x4xf32> to vector<8x4xf32>
    %5 = arith.addf %2, %4 : vector<8x4xf32>
    %c0_5 = arith.constant 0 : index
    %c0_6 = arith.constant 0 : index
    %6 = vector.load %arg4[%c0_5, %c0_6] : memref<8x4xf32, #tpu.memory_space<vmem>>, vector<8x4xf32>
    tpu.vector_store %arg4[%c0_5, %c0_6], %5 {strides = array<i32>} : memref<8x4xf32, #tpu.memory_space<vmem>>, vector<8x4xf32>,
    return
  }
  func.func @transform_0(%arg0: i32) -> (i32, i32) {
    %c0_i32 = arith.constant 0 : i32
    %c0_i32_0 = arith.constant 0 : i32
    return %arg0, %c0_i32 : i32, i32
  }
  func.func @transform_1(%arg0: i32) -> (i32, i32) {
    %c0_i32 = arith.constant 0 : i32
    %c0_i32_0 = arith.constant 0 : i32
    %c0_i32_1 = arith.constant 0 : i32
    return %c0_i32, %c0_i32_0 : i32, i32
  }
  func.func @transform_2(%arg0: i32) -> (i32, i32) {
    %c0_i32 = arith.constant 0 : i32
    %c0_i32_0 = arith.constant 0 : i32
    %c0_i32_1 = arith.constant 0 : i32
    return %c0_i32, %c0_i32_0 : i32, i32
  }
  func.func @transform_3(%arg0: i32) -> (i32, i32) {
    %c0_i32 = arith.constant 0 : i32
    %c0_i32_0 = arith.constant 0 : i32
    return %arg0, %c0_i32 : i32, i32
  }
}

module attributes {stable_mosaic.version = 11 : i64} {
  func.func @_conv_mm_kernel(%arg0: i32, %arg1: memref<8x36xbf16, #tpu.memory_space<vmem>>, %arg2: memref<36x32xbf16, #tpu.memory_space<vmem>>, %arg3: memref<1x32xf32, #tpu.memory_space<vmem>>, %arg4: memref<8x32xf32, #tpu.memory_space<vmem>>) attributes {dimension_semantics = [#tpu.dimension_semantics<parallel>], iteration_bounds = array<i64: 1>, scalar_prefetch = 0 : i64, scratch_operands = 0 : i64, tpu.core_type = #tpu.core_type<tc>, window_params = [{transform_indices = @transform_0, window_bounds = array<i64: 8, 36>}, {pipeline_mode = #tpu.pipeline_mode<synchronous>, transform_indices = @transform_1, window_bounds = array<i64: 36, 32>}, {pipeline_mode = #tpu.pipeline_mode<synchronous>, transform_indices = @transform_2, window_bounds = array<i64: 1, 32>}, {transform_indices = @transform_3, window_bounds = array<i64: 8, 32>}]} {
    %c0 = arith.constant 0 : index
    %c0_0 = arith.constant 0 : index
    %0 = vector.load %arg1[%c0, %c0_0] : memref<8x36xbf16, #tpu.memory_space<vmem>>, vector<8x36xbf16>
    %c0_1 = arith.constant 0 : index
    %c0_2 = arith.constant 0 : index
    %1 = vector.load %arg2[%c0_1, %c0_2] : memref<36x32xbf16, #tpu.memory_space<vmem>>, vector<36x32xbf16>
    %cst = arith.constant dense<0.000000e+00> : vector<8x32xf32>
    %2 = tpu.matmul %0, %1, %cst {dimension_numbers = #tpu.dot_dimension_numbers<[1], [0], [0], [1], [0, 0, 1, 1], [], []>} : vector<8x36xbf16>, vector<36x32xbf16>, vector<8x32xf32> -> vector<8x32xf32>
    %c0_3 = arith.constant 0 : index
    %c0_4 = arith.constant 0 : index
    %3 = vector.load %arg3[%c0_3, %c0_4] : memref<1x32xf32, #tpu.memory_space<vmem>>, vector<1x32xf32>
    %4 = vector.broadcast %3 : vector<1x32xf32> to vector<8x32xf32>
    %5 = arith.addf %2, %4 : vector<8x32xf32>
    %cst_5 = arith.constant 0.000000e+00 : f32
    %6 = vector.broadcast %cst_5 : f32 to vector<8x32xf32>
    %7 = arith.maximumf %5, %6 : vector<8x32xf32>
    %c0_6 = arith.constant 0 : index
    %c0_7 = arith.constant 0 : index
    %8 = vector.load %arg4[%c0_6, %c0_7] : memref<8x32xf32, #tpu.memory_space<vmem>>, vector<8x32xf32>
    tpu.vector_store %arg4[%c0_6, %c0_7], %7 {strides = array<i32>} : memref<8x32xf32, #tpu.memory_space<vmem>>, vector<8x32xf32>,
    return
  }
  func.func @transform_0(%arg0: i32) -> (i32, i32) {
    %c0_i32 = arith.constant 0 : i32
    %c0_i32_0 = arith.constant 0 : i32
    return %arg0, %c0_i32 : i32, i32
  }
  func.func @transform_1(%arg0: i32) -> (i32, i32) {
    %c0_i32 = arith.constant 0 : i32
    %c0_i32_0 = arith.constant 0 : i32
    %c0_i32_1 = arith.constant 0 : i32
    return %c0_i32, %c0_i32_0 : i32, i32
  }
  func.func @transform_2(%arg0: i32) -> (i32, i32) {
    %c0_i32 = arith.constant 0 : i32
    %c0_i32_0 = arith.constant 0 : i32
    %c0_i32_1 = arith.constant 0 : i32
    return %c0_i32, %c0_i32_0 : i32, i32
  }
  func.func @transform_3(%arg0: i32) -> (i32, i32) {
    %c0_i32 = arith.constant 0 : i32
    %c0_i32_0 = arith.constant 0 : i32
    return %arg0, %c0_i32 : i32, i32
  }
}

module attributes {stable_mosaic.version = 11 : i64} {
  func.func @_gaussian_entropy_kernel(%arg0: memref<8x128xf32, #tpu.memory_space<vmem>>, %arg1: memref<8x128xf32, #tpu.memory_space<vmem>>, %arg2: memref<8x128xf32, #tpu.memory_space<vmem>>, %arg3: memref<8x128xf32, #tpu.memory_space<vmem>>, %arg4: memref<8x128xf32, #tpu.memory_space<vmem>>, %arg5: memref<1x1xf32, #tpu.memory_space<smem>>) attributes {dimension_semantics = [], scalar_prefetch = 0 : i64, scratch_operands = 0 : i64, tpu.core_type = #tpu.core_type<tc>} {
    %c0 = arith.constant 0 : index
    %c0_0 = arith.constant 0 : index
    %0 = vector.load %arg0[%c0, %c0_0] : memref<8x128xf32, #tpu.memory_space<vmem>>, vector<8x128xf32>
    %c0_1 = arith.constant 0 : index
    %c0_2 = arith.constant 0 : index
    %1 = vector.load %arg1[%c0_1, %c0_2] : memref<8x128xf32, #tpu.memory_space<vmem>>, vector<8x128xf32>
    %2 = arith.addf %0, %1 : vector<8x128xf32>
    %c0_3 = arith.constant 0 : index
    %c0_4 = arith.constant 0 : index
    %3 = vector.load %arg4[%c0_3, %c0_4] : memref<8x128xf32, #tpu.memory_space<vmem>>, vector<8x128xf32>
    tpu.vector_store %arg4[%c0_3, %c0_4], %2 {strides = array<i32>} : memref<8x128xf32, #tpu.memory_space<vmem>>, vector<8x128xf32>,
    %c0_5 = arith.constant 0 : index
    %c0_6 = arith.constant 0 : index
    %4 = vector.load %arg2[%c0_5, %c0_6] : memref<8x128xf32, #tpu.memory_space<vmem>>, vector<8x128xf32>
    %cst = arith.constant 1.100000e-01 : f32
    %5 = vector.broadcast %cst : f32 to vector<8x128xf32>
    %6 = arith.maximumf %4, %5 : vector<8x128xf32>
    %7 = tpu.reciprocal %6 {approx = true} : vector<8x128xf32> -> vector<8x128xf32>
    %cst_7 = arith.constant 5.000000e-01 : f32
    %8 = vector.broadcast %cst_7 : f32 to vector<8x128xf32>
    %9 = arith.addf %2, %8 : vector<8x128xf32>
    %10 = arith.mulf %9, %7 : vector<8x128xf32>
    %cst_8 = arith.constant 4.471500e-02 : f32
    %11 = vector.broadcast %cst_8 : f32 to vector<8x128xf32>
    %12 = arith.mulf %11, %10 : vector<8x128xf32>
    %13 = arith.mulf %12, %10 : vector<8x128xf32>
    %14 = arith.mulf %13, %10 : vector<8x128xf32>
    %15 = arith.addf %10, %14 : vector<8x128xf32>
    %cst_9 = arith.constant 0.797884583 : f32
    %16 = vector.broadcast %cst_9 : f32 to vector<8x128xf32>
    %17 = arith.mulf %16, %15 : vector<8x128xf32>
    %18 = math.tanh %17 : vector<8x128xf32>
    %cst_10 = arith.constant 1.000000e+00 : f32
    %19 = vector.broadcast %cst_10 : f32 to vector<8x128xf32>
    %20 = arith.addf %19, %18 : vector<8x128xf32>
    %cst_11 = arith.constant 5.000000e-01 : f32
    %21 = vector.broadcast %cst_11 : f32 to vector<8x128xf32>
    %22 = arith.mulf %21, %20 : vector<8x128xf32>
    %cst_12 = arith.constant 5.000000e-01 : f32
    %23 = vector.broadcast %cst_12 : f32 to vector<8x128xf32>
    %24 = arith.subf %2, %23 : vector<8x128xf32>
    %25 = arith.mulf %24, %7 : vector<8x128xf32>
    %cst_13 = arith.constant 4.471500e-02 : f32
    %26 = vector.broadcast %cst_13 : f32 to vector<8x128xf32>
    %27 = arith.mulf %26, %25 : vector<8x128xf32>
    %28 = arith.mulf %27, %25 : vector<8x128xf32>
    %29 = arith.mulf %28, %25 : vector<8x128xf32>
    %30 = arith.addf %25, %29 : vector<8x128xf32>
    %cst_14 = arith.constant 0.797884583 : f32
    %31 = vector.broadcast %cst_14 : f32 to vector<8x128xf32>
    %32 = arith.mulf %31, %30 : vector<8x128xf32>
    %33 = math.tanh %32 : vector<8x128xf32>
    %cst_15 = arith.constant 1.000000e+00 : f32
    %34 = vector.broadcast %cst_15 : f32 to vector<8x128xf32>
    %35 = arith.addf %34, %33 : vector<8x128xf32>
    %cst_16 = arith.constant 5.000000e-01 : f32
    %36 = vector.broadcast %cst_16 : f32 to vector<8x128xf32>
    %37 = arith.mulf %36, %35 : vector<8x128xf32>
    %38 = arith.subf %22, %37 : vector<8x128xf32>
    %cst_17 = arith.constant 9.99999971E-10 : f32
    %39 = vector.broadcast %cst_17 : f32 to vector<8x128xf32>
    %40 = arith.maximumf %38, %39 : vector<8x128xf32>
    %41 = math.log %40 : vector<8x128xf32>
    %cst_18 = arith.constant 0.000000e+00 : f32
    %42 = vector.broadcast %cst_18 : f32 to vector<8x128xf32>
    %43 = arith.subf %42, %41 : vector<8x128xf32>
    %c0_19 = arith.constant 0 : index
    %c0_20 = arith.constant 0 : index
    %44 = vector.load %arg3[%c0_19, %c0_20] : memref<8x128xf32, #tpu.memory_space<vmem>>, vector<8x128xf32>
    %45 = arith.mulf %43, %44 : vector<8x128xf32>
    %46 = vector.shape_cast %45 : vector<8x128xf32> to vector<1x8x128xf32>
    %cst_21 = arith.constant dense<0.000000e+00> : vector<1xf32>
    %47 = vector.multi_reduction <add>, %46, %cst_21 [1, 2] : vector<1x8x128xf32> to vector<1xf32>
    %48 = vector.shape_cast %47 : vector<1xf32> to vector<1x1x1xf32>
    %49 = vector.extract %48[0, 0, 0] : f32 from vector<1x1x1xf32>
    %cst_22 = arith.constant 1.44269502 : f32
    %50 = arith.mulf %49, %cst_22 : f32
    %c0_23 = arith.constant 0 : index
    %c0_24 = arith.constant 0 : index
    %51 = memref.load %arg5[%c0_23, %c0_24] : memref<1x1xf32, #tpu.memory_space<smem>>
    memref.store %50, %arg5[%c0_23, %c0_24] : memref<1x1xf32, #tpu.memory_space<smem>>
    return
  }
}

module attributes {stable_mosaic.version = 11 : i64} {
  func.func @_conv_mm_kernel(%arg0: i32, %arg1: memref<32x72xbf16, #tpu.memory_space<vmem>>, %arg2: memref<72x8xbf16, #tpu.memory_space<vmem>>, %arg3: memref<1x8xf32, #tpu.memory_space<vmem>>, %arg4: memref<32x8xf32, #tpu.memory_space<vmem>>) attributes {dimension_semantics = [#tpu.dimension_semantics<parallel>], iteration_bounds = array<i64: 1>, scalar_prefetch = 0 : i64, scratch_operands = 0 : i64, tpu.core_type = #tpu.core_type<tc>, window_params = [{transform_indices = @transform_0, window_bounds = array<i64: 32, 72>}, {pipeline_mode = #tpu.pipeline_mode<synchronous>, transform_indices = @transform_1, window_bounds = array<i64: 72, 8>}, {pipeline_mode = #tpu.pipeline_mode<synchronous>, transform_indices = @transform_2, window_bounds = array<i64: 1, 8>}, {transform_indices = @transform_3, window_bounds = array<i64: 32, 8>}]} {
    %c0 = arith.constant 0 : index
    %c0_0 = arith.constant 0 : index
    %0 = vector.load %arg1[%c0, %c0_0] : memref<32x72xbf16, #tpu.memory_space<vmem>>, vector<32x72xbf16>
    %c0_1 = arith.constant 0 : index
    %c0_2 = arith.constant 0 : index
    %1 = vector.load %arg2[%c0_1, %c0_2] : memref<72x8xbf16, #tpu.memory_space<vmem>>, vector<72x8xbf16>
    %cst = arith.constant dense<0.000000e+00> : vector<32x8xf32>
    %2 = tpu.matmul %0, %1, %cst {dimension_numbers = #tpu.dot_dimension_numbers<[1], [0], [0], [1], [0, 0, 1, 1], [], []>} : vector<32x72xbf16>, vector<72x8xbf16>, vector<32x8xf32> -> vector<32x8xf32>
    %c0_3 = arith.constant 0 : index
    %c0_4 = arith.constant 0 : index
    %3 = vector.load %arg3[%c0_3, %c0_4] : memref<1x8xf32, #tpu.memory_space<vmem>>, vector<1x8xf32>
    %4 = vector.broadcast %3 : vector<1x8xf32> to vector<32x8xf32>
    %5 = arith.addf %2, %4 : vector<32x8xf32>
    %c0_5 = arith.constant 0 : index
    %c0_6 = arith.constant 0 : index
    %6 = vector.load %arg4[%c0_5, %c0_6] : memref<32x8xf32, #tpu.memory_space<vmem>>, vector<32x8xf32>
    tpu.vector_store %arg4[%c0_5, %c0_6], %5 {strides = array<i32>} : memref<32x8xf32, #tpu.memory_space<vmem>>, vector<32x8xf32>,
    return
  }
  func.func @transform_0(%arg0: i32) -> (i32, i32) {
    %c0_i32 = arith.constant 0 : i32
    %c0_i32_0 = arith.constant 0 : i32
    return %arg0, %c0_i32 : i32, i32
  }
  func.func @transform_1(%arg0: i32) -> (i32, i32) {
    %c0_i32 = arith.constant 0 : i32
    %c0_i32_0 = arith.constant 0 : i32
    %c0_i32_1 = arith.constant 0 : i32
    return %c0_i32, %c0_i32_0 : i32, i32
  }
  func.func @transform_2(%arg0: i32) -> (i32, i32) {
    %c0_i32 = arith.constant 0 : i32
    %c0_i32_0 = arith.constant 0 : i32
    %c0_i32_1 = arith.constant 0 : i32
    return %c0_i32, %c0_i32_0 : i32, i32
  }
  func.func @transform_3(%arg0: i32) -> (i32, i32) {
    %c0_i32 = arith.constant 0 : i32
    %c0_i32_0 = arith.constant 0 : i32
    return %arg0, %c0_i32 : i32, i32
  }
}

module attributes {stable_mosaic.version = 11 : i64} {
  func.func @_conv_mm_gdn_kernel(%arg0: i32, %arg1: memref<32x72xbf16, #tpu.memory_space<vmem>>, %arg2: memref<72x32xbf16, #tpu.memory_space<vmem>>, %arg3: memref<1x32xf32, #tpu.memory_space<vmem>>, %arg4: memref<32x32xf32, #tpu.memory_space<vmem>>, %arg5: memref<1x32xf32, #tpu.memory_space<vmem>>, %arg6: memref<32x32xf32, #tpu.memory_space<vmem>>) attributes {dimension_semantics = [#tpu.dimension_semantics<parallel>], iteration_bounds = array<i64: 1>, scalar_prefetch = 0 : i64, scratch_operands = 0 : i64, tpu.core_type = #tpu.core_type<tc>, window_params = [{transform_indices = @transform_0, window_bounds = array<i64: 32, 72>}, {pipeline_mode = #tpu.pipeline_mode<synchronous>, transform_indices = @transform_1, window_bounds = array<i64: 72, 32>}, {pipeline_mode = #tpu.pipeline_mode<synchronous>, transform_indices = @transform_2, window_bounds = array<i64: 1, 32>}, {pipeline_mode = #tpu.pipeline_mode<synchronous>, transform_indices = @transform_3, window_bounds = array<i64: 32, 32>}, {pipeline_mode = #tpu.pipeline_mode<synchronous>, transform_indices = @transform_4, window_bounds = array<i64: 1, 32>}, {transform_indices = @transform_5, window_bounds = array<i64: 32, 32>}]} {
    %c0 = arith.constant 0 : index
    %c0_0 = arith.constant 0 : index
    %0 = vector.load %arg1[%c0, %c0_0] : memref<32x72xbf16, #tpu.memory_space<vmem>>, vector<32x72xbf16>
    %c0_1 = arith.constant 0 : index
    %c0_2 = arith.constant 0 : index
    %1 = vector.load %arg2[%c0_1, %c0_2] : memref<72x32xbf16, #tpu.memory_space<vmem>>, vector<72x32xbf16>
    %cst = arith.constant dense<0.000000e+00> : vector<32x32xf32>
    %2 = tpu.matmul %0, %1, %cst {dimension_numbers = #tpu.dot_dimension_numbers<[1], [0], [0], [1], [0, 0, 1, 1], [], []>} : vector<32x72xbf16>, vector<72x32xbf16>, vector<32x32xf32> -> vector<32x32xf32>
    %c0_3 = arith.constant 0 : index
    %c0_4 = arith.constant 0 : index
    %3 = vector.load %arg3[%c0_3, %c0_4] : memref<1x32xf32, #tpu.memory_space<vmem>>, vector<1x32xf32>
    %4 = vector.broadcast %3 : vector<1x32xf32> to vector<32x32xf32>
    %5 = arith.addf %2, %4 : vector<32x32xf32>
    %6 = arith.mulf %5, %5 : vector<32x32xf32>
    %c0_5 = arith.constant 0 : index
    %c0_6 = arith.constant 0 : index
    %7 = vector.load %arg4[%c0_5, %c0_6] : memref<32x32xf32, #tpu.memory_space<vmem>>, vector<32x32xf32>
    %cst_7 = arith.constant dense<0.000000e+00> : vector<32x32xf32>
    %8 = tpu.matmul %6, %7, %cst_7 {dimension_numbers = #tpu.dot_dimension_numbers<[1], [0], [0], [1], [0, 0, 1, 1], [], []>} : vector<32x32xf32>, vector<32x32xf32>, vector<32x32xf32> -> vector<32x32xf32>
    %c0_8 = arith.constant 0 : index
    %c0_9 = arith.constant 0 : index
    %9 = vector.load %arg5[%c0_8, %c0_9] : memref<1x32xf32, #tpu.memory_space<vmem>>, vector<1x32xf32>
    %10 = vector.broadcast %9 : vector<1x32xf32> to vector<32x32xf32>
    %11 = arith.addf %8, %10 : vector<32x32xf32>
    %12 = math.sqrt %11 : vector<32x32xf32>
    %13 = arith.mulf %5, %12 : vector<32x32xf32>
    %c0_10 = arith.constant 0 : index
    %c0_11 = arith.constant 0 : index
    %14 = vector.load %arg6[%c0_10, %c0_11] : memref<32x32xf32, #tpu.memory_space<vmem>>, vector<32x32xf32>
    tpu.vector_store %arg6[%c0_10, %c0_11], %13 {strides = array<i32>} : memref<32x32xf32, #tpu.memory_space<vmem>>, vector<32x32xf32>,
    return
  }
  func.func @transform_0(%arg0: i32) -> (i32, i32) {
    %c0_i32 = arith.constant 0 : i32
    %c0_i32_0 = arith.constant 0 : i32
    return %arg0, %c0_i32 : i32, i32
  }
  func.func @transform_1(%arg0: i32) -> (i32, i32) {
    %c0_i32 = arith.constant 0 : i32
    %c0_i32_0 = arith.constant 0 : i32
    %c0_i32_1 = arith.constant 0 : i32
    return %c0_i32, %c0_i32_0 : i32, i32
  }
  func.func @transform_2(%arg0: i32) -> (i32, i32) {
    %c0_i32 = arith.constant 0 : i32
    %c0_i32_0 = arith.constant 0 : i32
    %c0_i32_1 = arith.constant 0 : i32
    return %c0_i32, %c0_i32_0 : i32, i32
  }
  func.func @transform_3(%arg0: i32) -> (i32, i32) {
    %c0_i32 = arith.constant 0 : i32
    %c0_i32_0 = arith.constant 0 : i32
    %c0_i32_1 = arith.constant 0 : i32
    return %c0_i32, %c0_i32_0 : i32, i32
  }
  func.func @transform_4(%arg0: i32) -> (i32, i32) {
    %c0_i32 = arith.constant 0 : i32
    %c0_i32_0 = arith.constant 0 : i32
    %c0_i32_1 = arith.constant 0 : i32
    return %c0_i32, %c0_i32_0 : i32, i32
  }
  func.func @transform_5(%arg0: i32) -> (i32, i32) {
    %c0_i32 = arith.constant 0 : i32
    %c0_i32_0 = arith.constant 0 : i32
    return %arg0, %c0_i32 : i32, i32
  }
}

module attributes {stable_mosaic.version = 11 : i64} {
  func.func @_conv_mm_kernel(%arg0: i32, %arg1: memref<128x72xbf16, #tpu.memory_space<vmem>>, %arg2: memref<72x12xbf16, #tpu.memory_space<vmem>>, %arg3: memref<1x12xf32, #tpu.memory_space<vmem>>, %arg4: memref<128x12xf32, #tpu.memory_space<vmem>>) attributes {dimension_semantics = [#tpu.dimension_semantics<parallel>], iteration_bounds = array<i64: 1>, scalar_prefetch = 0 : i64, scratch_operands = 0 : i64, tpu.core_type = #tpu.core_type<tc>, window_params = [{transform_indices = @transform_0, window_bounds = array<i64: 128, 72>}, {pipeline_mode = #tpu.pipeline_mode<synchronous>, transform_indices = @transform_1, window_bounds = array<i64: 72, 12>}, {pipeline_mode = #tpu.pipeline_mode<synchronous>, transform_indices = @transform_2, window_bounds = array<i64: 1, 12>}, {transform_indices = @transform_3, window_bounds = array<i64: 128, 12>}]} {
    %c0 = arith.constant 0 : index
    %c0_0 = arith.constant 0 : index
    %0 = vector.load %arg1[%c0, %c0_0] : memref<128x72xbf16, #tpu.memory_space<vmem>>, vector<128x72xbf16>
    %c0_1 = arith.constant 0 : index
    %c0_2 = arith.constant 0 : index
    %1 = vector.load %arg2[%c0_1, %c0_2] : memref<72x12xbf16, #tpu.memory_space<vmem>>, vector<72x12xbf16>
    %cst = arith.constant dense<0.000000e+00> : vector<128x12xf32>
    %2 = tpu.matmul %0, %1, %cst {dimension_numbers = #tpu.dot_dimension_numbers<[1], [0], [0], [1], [0, 0, 1, 1], [], []>} : vector<128x72xbf16>, vector<72x12xbf16>, vector<128x12xf32> -> vector<128x12xf32>
    %c0_3 = arith.constant 0 : index
    %c0_4 = arith.constant 0 : index
    %3 = vector.load %arg3[%c0_3, %c0_4] : memref<1x12xf32, #tpu.memory_space<vmem>>, vector<1x12xf32>
    %4 = vector.broadcast %3 : vector<1x12xf32> to vector<128x12xf32>
    %5 = arith.addf %2, %4 : vector<128x12xf32>
    %c0_5 = arith.constant 0 : index
    %c0_6 = arith.constant 0 : index
    %6 = vector.load %arg4[%c0_5, %c0_6] : memref<128x12xf32, #tpu.memory_space<vmem>>, vector<128x12xf32>
    tpu.vector_store %arg4[%c0_5, %c0_6], %5 {strides = array<i32>} : memref<128x12xf32, #tpu.memory_space<vmem>>, vector<128x12xf32>,
    return
  }
  func.func @transform_0(%arg0: i32) -> (i32, i32) {
    %c0_i32 = arith.constant 0 : i32
    %c0_i32_0 = arith.constant 0 : i32
    return %arg0, %c0_i32 : i32, i32
  }
  func.func @transform_1(%arg0: i32) -> (i32, i32) {
    %c0_i32 = arith.constant 0 : i32
    %c0_i32_0 = arith.constant 0 : i32
    %c0_i32_1 = arith.constant 0 : i32
    return %c0_i32, %c0_i32_0 : i32, i32
  }
  func.func @transform_2(%arg0: i32) -> (i32, i32) {
    %c0_i32 = arith.constant 0 : i32
    %c0_i32_0 = arith.constant 0 : i32
    %c0_i32_1 = arith.constant 0 : i32
    return %c0_i32, %c0_i32_0 : i32, i32
  }
  func.func @transform_3(%arg0: i32) -> (i32, i32) {
    %c0_i32 = arith.constant 0 : i32
    %c0_i32_0 = arith.constant 0 : i32
    return %arg0, %c0_i32 : i32, i32
  }
}

module attributes {stable_mosaic.version = 11 : i64} {
  func.func @_clamp_mse_kernel(%arg0: memref<16x128xf32, #tpu.memory_space<vmem>>, %arg1: memref<16x128xf32, #tpu.memory_space<vmem>>, %arg2: memref<16x128xf32, #tpu.memory_space<vmem>>, %arg3: memref<16x128xf32, #tpu.memory_space<vmem>>, %arg4: memref<1x1xf32, #tpu.memory_space<smem>>) attributes {dimension_semantics = [], scalar_prefetch = 0 : i64, scratch_operands = 0 : i64, tpu.core_type = #tpu.core_type<tc>} {
    %c0 = arith.constant 0 : index
    %c0_0 = arith.constant 0 : index
    %0 = vector.load %arg0[%c0, %c0_0] : memref<16x128xf32, #tpu.memory_space<vmem>>, vector<16x128xf32>
    %cst = arith.constant 0.000000e+00 : f32
    %cst_1 = arith.constant 1.000000e+00 : f32
    %1 = vector.broadcast %cst : f32 to vector<16x128xf32>
    %2 = arith.maximumf %1, %0 : vector<16x128xf32>
    %3 = vector.broadcast %cst_1 : f32 to vector<16x128xf32>
    %4 = arith.minimumf %3, %2 : vector<16x128xf32>
    %c0_2 = arith.constant 0 : index
    %c0_3 = arith.constant 0 : index
    %5 = vector.load %arg3[%c0_2, %c0_3] : memref<16x128xf32, #tpu.memory_space<vmem>>, vector<16x128xf32>
    tpu.vector_store %arg3[%c0_2, %c0_3], %4 {strides = array<i32>} : memref<16x128xf32, #tpu.memory_space<vmem>>, vector<16x128xf32>,
    %c0_4 = arith.constant 0 : index
    %c0_5 = arith.constant 0 : index
    %6 = vector.load %arg1[%c0_4, %c0_5] : memref<16x128xf32, #tpu.memory_space<vmem>>, vector<16x128xf32>
    %7 = arith.subf %4, %6 : vector<16x128xf32>
    %c0_6 = arith.constant 0 : index
    %c0_7 = arith.constant 0 : index
    %8 = vector.load %arg2[%c0_6, %c0_7] : memref<16x128xf32, #tpu.memory_space<vmem>>, vector<16x128xf32>
    %9 = arith.mulf %7, %8 : vector<16x128xf32>
    %10 = arith.mulf %9, %9 : vector<16x128xf32>
    %11 = vector.shape_cast %10 : vector<16x128xf32> to vector<1x16x128xf32>
    %cst_8 = arith.constant dense<0.000000e+00> : vector<1xf32>
    %12 = vector.multi_reduction <add>, %11, %cst_8 [1, 2] : vector<1x16x128xf32> to vector<1xf32>
    %13 = vector.shape_cast %12 : vector<1xf32> to vector<1x1x1xf32>
    %14 = vector.extract %13[0, 0, 0] : f32 from vector<1x1x1xf32>
    %c0_9 = arith.constant 0 : index
    %c0_10 = arith.constant 0 : index
    %15 = memref.load %arg4[%c0_9, %c0_10] : memref<1x1xf32, #tpu.memory_space<smem>>
    memref.store %14, %arg4[%c0_9, %c0_10] : memref<1x1xf32, #tpu.memory_space<smem>>
    return
  }
}

</mosaic_0001>

<llo_original>
// kernel: tile.23
$region0: #{tile.23}
  #allocation0 [shape = 's32[1]{0}', space=sflag, size = 0x4, scoped, tag = 'scoped memory for tile.23']
  %s0 = inlined_call_operand.vmem [shape: f32[8], index: 0, kind: input, shape index: {}]
  %s1 = inlined_call_operand.vmem [shape: f32[4,8], index: 1, kind: output, shape index: {}]
  // Predicated region
  $region2: #{tile.23} parent=0 // pred_check
    _
  $region3: #{tile.23} parent=0 // pred_check_branch
    %3 = sbr.rel (0) target = $region5
  $region4: #{tile.23} parent=0 // pred_region
    _
  $region5: #{tile.23} parent=0 // pred_fallthru
    _
  %v4 = vld [vmem:[%s0] ss:$0 sm:$0xff]
  %5 = vst [vmem:[%s1] sm:$0xf] %v4

// kernel: tile.24
$region0: #{tile.24}
  %s0 = inlined_call_operand.vmem [shape: f32[4,8], index: 0, kind: input, shape index: {}]
  %s1 = inlined_call_operand.vmem [shape: f32[1,32], index: 1, kind: output, shape index: {}]
  $region1: #{tile.24} parent=0
    #allocation0 [shape = 'u8[4096]{0}', space=vmem, size = 0x1000, scoped, tag = 'scoped mem for output reshape']
    #allocation1 [shape = 'u8[4096]{0}', space=vmem, size = 0x1000, scoped, tag = 'scoped mem for input reshape']
    %s3 = ssub.s32 16, 1
    %v4 = vld [vmem:[%s0] sm:%s3]
    %5 = vst [vmem:[#allocation1] sm:%s3] %v4
    %v6 = vld [vmem:[#allocation1] sm:$0x1]
    %vm7 = vcmask 64512
    %8 = vst.msk [vmem:[#allocation0] sm:$0x1] %vm7, %v6
    %s9 = scalar_lea.vmem [#allocation1], 3
    %v10 = vld [vmem:[%s9] sm:$0x1]
    %11 = vrot.lane.b32.xlu0 %v10, 24
    %v12 = vpop.permute.xlu0 %11
    %vm13 = vcmask 261312
    %14 = vst.msk [vmem:[#allocation0] sm:$0x1] %vm13, %v12
    %s15 = scalar_lea.vmem [#allocation1], 2
    %v16 = vld [vmem:[%s15] sm:$0x1]
    %17 = vrot.lane.b32.xlu0 %v16, 16
    %v18 = vpop.permute.xlu0 %17
    %vm19 = vcmask 195712
    %20 = vst.msk [vmem:[#allocation0] sm:$0x1] %vm19, %v18
    %s21 = scalar_lea.vmem [#allocation1], 1
    %v22 = vld [vmem:[%s21] sm:$0x1]
    %23 = vrot.lane.b32.xlu0 %v22, 8
    %v24 = vpop.permute.xlu0 %23
    %vm25 = vcmask 130112
    %26 = vst.msk [vmem:[#allocation0] sm:$0x1] %vm25, %v24
    %s28 = ssub.s32 2, 1
    %v29 = vld [vmem:[#allocation0] sm:%s28]
    %s31 = ssub.s32 2, 1
    %32 = vst [vmem:[%s1] sm:%s31] %v29

// kernel: tile.38
$region0: #{tile.38}
  #allocation0 [shape = 's32[1]{0}', space=sflag, size = 0x4, scoped, tag = 'scoped memory for tile.38']
  %s0 = inlined_call_operand.vmem [shape: f32[3], index: 0, kind: input, shape index: {}]
  %s1 = inlined_call_operand.vmem [shape: f32[4,3], index: 1, kind: output, shape index: {}]
  // Predicated region
  $region2: #{tile.38} parent=0 // pred_check
    _
  $region3: #{tile.38} parent=0 // pred_check_branch
    %3 = sbr.rel (0) target = $region5
  $region4: #{tile.38} parent=0 // pred_region
    _
  $region5: #{tile.38} parent=0 // pred_fallthru
    _
  %v4 = vld [vmem:[%s0] ss:$0 sm:$0xff]
  %5 = vst [vmem:[%s1] sm:$0xf] %v4

// kernel: tile.39
$region0: #{tile.39}
  %s0 = inlined_call_operand.vmem [shape: f32[4,3], index: 0, kind: input, shape index: {}]
  %s1 = inlined_call_operand.vmem [shape: f32[1,12], index: 1, kind: output, shape index: {}]
  $region1: #{tile.39} parent=0
    #allocation0 [shape = 'u8[4096]{0}', space=vmem, size = 0x1000, scoped, tag = 'scoped mem for output reshape']
    #allocation1 [shape = 'u8[4096]{0}', space=vmem, size = 0x1000, scoped, tag = 'scoped mem for input reshape']
    %s3 = ssub.s32 16, 1
    %v4 = vld [vmem:[%s0] sm:%s3]
    %5 = vst [vmem:[#allocation1] sm:%s3] %v4
    %v6 = vld [vmem:[#allocation1] sm:$0x1]
    %vm7 = vcmask 23552
    %8 = vst.msk [vmem:[#allocation0] sm:$0x1] %vm7, %v6
    %s9 = scalar_lea.vmem [#allocation1], 3
    %v10 = vld [vmem:[%s9] sm:$0x1]
    %11 = vrot.lane.b32.xlu0 %v10, 9
    %v12 = vpop.permute.xlu0 %11
    %vm13 = vcmask 97352
    %14 = vst.msk [vmem:[#allocation0] sm:$0x1] %vm13, %v12
    %s15 = scalar_lea.vmem [#allocation1], 2
    %v16 = vld [vmem:[%s15] sm:$0x1]
    %17 = vrot.lane.b32.xlu0 %v16, 6
    %v18 = vpop.permute.xlu0 %17
    %vm19 = vcmask 72752
    %20 = vst.msk [vmem:[#allocation0] sm:$0x1] %vm19, %v18
    %s21 = scalar_lea.vmem [#allocation1], 1
    %v22 = vld [vmem:[%s21] sm:$0x1]
    %23 = vrot.lane.b32.xlu0 %v22, 3
    %v24 = vpop.permute.xlu0 %23
    %vm25 = vcmask 48152
    %26 = vst.msk [vmem:[#allocation0] sm:$0x1] %vm25, %v24
    %s28 = ssub.s32 2, 1
    %v29 = vld [vmem:[#allocation0] sm:%s28]
    %s31 = ssub.s32 2, 1
    %32 = vst [vmem:[%s1] sm:%s31] %v29

// kernel: compressor2018_forward.11
$region0: #{compressor2018_forward.11}
  #allocation0 [shape = 'u32[]', space=smem, size = 0x4, offset = 0x4, fixed_abs, tag = 'smem constant byte address 0x4 - core index']
  #allocation1 [shape = 'u32[72,128]{1,0:T(1,128)}', space=vmem, size = 0x9000, scoped, tag = 'internal scratch']
  %s0 = inlined_call_operand.vmem [shape: bf16[128,75], index: 0, kind: input, shape index: {}]
  %s1 = inlined_call_operand.vmem [shape: bf16[75,8], index: 1, kind: input, shape index: {}]
  %s2 = inlined_call_operand.vmem [shape: f32[1,8], index: 2, kind: input, shape index: {}]
  %s3 = inlined_call_operand.vmem [shape: f32[8,8], index: 3, kind: input, shape index: {}]
  %s4 = inlined_call_operand.vmem [shape: f32[1,8], index: 4, kind: input, shape index: {}]
  %s5 = inlined_call_operand.vmem [shape: f32[128,8], index: 5, kind: output, shape index: {}]
  %s6 = sld [smem:[#allocation0]]
  $region30: #{compressor2018_forward.11} parent=0
    _
  %s8 = ssub.s32 1, %s6
  %s9 = scalar_select 0, %s8, %s6
  // Predicated region
  $region2: #{compressor2018_forward.11} parent=0 // pred_check
    _
  $region3: #{compressor2018_forward.11} parent=0 // pred_check_branch
    %11 = sbr.rel (0) target = $region5
  $region4: #{compressor2018_forward.11} parent=0 // pred_region
    _
  $region5: #{compressor2018_forward.11} parent=0 // pred_fallthru
    _
  // Predicated region
  $region6: #{compressor2018_forward.11} parent=0 // pred_check
    _
  $region7: #{compressor2018_forward.11} parent=0 // pred_check_branch
    %13 = sbr.rel (0) target = $region9
  $region8: #{compressor2018_forward.11} parent=0 // pred_region
    _
  $region9: #{compressor2018_forward.11} parent=0 // pred_fallthru
    _
  // Predicated region
  $region10: #{compressor2018_forward.11} parent=0 // pred_check
    _
  $region11: #{compressor2018_forward.11} parent=0 // pred_check_branch
    %15 = sbr.rel (0) target = $region13
  $region12: #{compressor2018_forward.11} parent=0 // pred_region
    _
  $region13: #{compressor2018_forward.11} parent=0 // pred_fallthru
    _
  // Predicated region
  $region14: #{compressor2018_forward.11} parent=0 // pred_check
    _
  $region15: #{compressor2018_forward.11} parent=0 // pred_check_branch
    %17 = sbr.rel (0) target = $region17
  $region16: #{compressor2018_forward.11} parent=0 // pred_region
    _
  $region17: #{compressor2018_forward.11} parent=0 // pred_fallthru
    _
  // Predicated region
  $region18: #{compressor2018_forward.11} parent=0 // pred_check
    _
  $region19: #{compressor2018_forward.11} parent=0 // pred_check_branch
    %19 = sbr.rel (0) target = $region21
  $region20: #{compressor2018_forward.11} parent=0 // pred_region
    _
  $region21: #{compressor2018_forward.11} parent=0 // pred_fallthru
    _
  %v21 = vld [vmem:[%s0] sm:$0xf]
  %v22 = vld [vmem:[%s0 + $0x4] sm:$0xf]
  %v23 = vld [vmem:[%s0 + $0x8] sm:$0xf]
  %v24 = vld [vmem:[%s0 + $0xc] sm:$0xf]
  %v25 = vld [vmem:[%s0 + $0x10] sm:$0xf]
  %v26 = vld [vmem:[%s0 + $0x14] sm:$0xf]
  %v27 = vld [vmem:[%s0 + $0x18] sm:$0xf]
  %v28 = vld [vmem:[%s0 + $0x1c] sm:$0xf]
  %v29 = vld [vmem:[%s0 + $0x20] sm:$0xf]
  %v30 = vld [vmem:[%s0 + $0x24] sm:$0xf]
  %v31 = vld [vmem:[%s0 + $0x28] sm:$0xf]
  %v32 = vld [vmem:[%s0 + $0x2c] sm:$0xf]
  %v33 = vld [vmem:[%s0 + $0x30] sm:$0xf]
  %v34 = vld [vmem:[%s0 + $0x34] sm:$0xf]
  %v35 = vld [vmem:[%s0 + $0x38] sm:$0xf]
  %v36 = vld [vmem:[%s0 + $0x3c] sm:$0xf]
  %v37 = vld [vmem:[%s1] sm:$0xf]
  %v38 = vld [vmem:[%s1 + $0x4] sm:$0xf]
  %v39 = vld [vmem:[%s1 + $0x8] sm:$0xf]
  %v40 = vld [vmem:[%s1 + $0xc] sm:$0xf]
  %v41 = vld [vmem:[%s1 + $0x10] sm:$0xf]
  %v42 = vld [vmem:[%s1 + $0x14] sm:$0xf]
  %v43 = vld [vmem:[%s1 + $0x18] sm:$0xf]
  %v44 = vld [vmem:[%s1 + $0x1c] sm:$0xf]
  %v45 = vld [vmem:[%s1 + $0x20] sm:$0xf]
  %v46 = vld [vmem:[%s1 + $0x24] sm:$0x3]
  %v47 = vld [vmem:[%s2] sm:$0x1]
  %v49 = vperm.slane %v47, 0
  %v67 = vunpack.c.l.b16 %v21
  %v68 = vunpack.c.l.b16 %v22
  %v69 = vunpack.c.l.b16 %v23
  %v70 = vunpack.c.l.b16 %v24
  %v71 = vunpack.c.l.b16 %v25
  %v72 = vunpack.c.l.b16 %v26
  %v73 = vunpack.c.l.b16 %v27
  %v74 = vunpack.c.l.b16 %v28
  %v75 = vunpack.c.l.b16 %v29
  %v76 = vunpack.c.l.b16 %v30
  %v77 = vunpack.c.l.b16 %v31
  %v78 = vunpack.c.l.b16 %v32
  %v79 = vunpack.c.l.b16 %v33
  %v80 = vunpack.c.l.b16 %v34
  %v81 = vunpack.c.l.b16 %v35
  %v82 = vunpack.c.l.b16 %v36
  %v83 = vpack.c.b16 %v68, %v67
  %v84 = vpack.c.b16 %v70, %v69
  %v85 = vpack.c.b16 %v72, %v71
  %v86 = vpack.c.b16 %v74, %v73
  %v87 = vpack.c.b16 %v76, %v75
  %v88 = vpack.c.b16 %v78, %v77
  %v89 = vpack.c.b16 %v80, %v79
  %v90 = vpack.c.b16 %v82, %v81
  %v101 = vunpack.c.l.b16 %v37
  %v102 = vunpack.c.l.b16 %v38
  %v103 = vunpack.c.l.b16 %v39
  %v104 = vunpack.c.l.b16 %v40
  %v105 = vunpack.c.l.b16 %v41
  %v106 = vunpack.c.l.b16 %v42
  %v107 = vunpack.c.l.b16 %v43
  %v108 = vunpack.c.l.b16 %v44
  %v109 = vunpack.c.l.b16 %v45
  %v110 = vunpack.c.l.b16 %v46
  %v111 = vpack.c.b16 %v102, %v101
  %v112 = vpack.c.b16 %v104, %v103
  %v113 = vpack.c.b16 %v106, %v105
  %v114 = vpack.c.b16 %v108, %v107
  %v115 = vpack.c.b16 %v110, %v109
  %vm120 = vcmask 613376
  %v122 = vsel %vm120, %v83, 0
  %v125 = vsel %vm120, %v84, 0
  %v128 = vsel %vm120, %v85, 0
  %v131 = vsel %vm120, %v86, 0
  %v134 = vsel %vm120, %v87, 0
  %v137 = vsel %vm120, %v88, 0
  %v140 = vsel %vm120, %v89, 0
  %v143 = vsel %vm120, %v90, 0
  %vm145 = vcmask 1044480
  %vm146 = vcmask 1045504
  %v147 = vsel %vm145, 4294967295, 65535
  %v148 = vsel %vm146, %v147, 0
  %v150 = vand.u32 %v115, %v148
  %152 = vmatpush.bf16.msra.mxu0 0
  %153 = vmatpush.bf16.msra.mxu0 0
  %154 = vmatpush.bf16.msra.mxu0 0
  %155 = vmatpush.bf16.msra.mxu0 %v150
  %156 = vmatpush.bf16.msra.mxu0 %v114
  %157 = vmatpush.bf16.msra.mxu0 %v113
  %158 = vmatpush.bf16.msra.mxu0 %v112
  %159 = vmatpush.bf16.msra.mxu0 %v111
  %160 = vmatmul.bf16.gmra.mxu0 %v122
  %v161 = vpop.f32.mrf.mxu0
  %v162 = vadd.f32 %v49, %v161
  %v163 = vpop.f32.mrf.mxu0
  %v164 = vadd.f32 %v49, %v163
  %165 = vmatmul.bf16.gmra.mxu0 %v125
  %v166 = vpop.f32.mrf.mxu0
  %v167 = vadd.f32 %v49, %v166
  %v168 = vpop.f32.mrf.mxu0
  %v169 = vadd.f32 %v49, %v168
  %170 = vmatmul.bf16.gmra.mxu0 %v128
  %v171 = vpop.f32.mrf.mxu0
  %v172 = vadd.f32 %v49, %v171
  %v173 = vpop.f32.mrf.mxu0
  %v174 = vadd.f32 %v49, %v173
  %175 = vmatmul.bf16.gmra.mxu0 %v131
  %v176 = vpop.f32.mrf.mxu0
  %v177 = vadd.f32 %v49, %v176
  %v178 = vpop.f32.mrf.mxu0
  %v179 = vadd.f32 %v49, %v178
  %180 = vmatmul.bf16.gmra.mxu0 %v134
  %v181 = vpop.f32.mrf.mxu0
  %v182 = vadd.f32 %v49, %v181
  %v183 = vpop.f32.mrf.mxu0
  %v184 = vadd.f32 %v49, %v183
  %185 = vmatmul.bf16.gmra.mxu0 %v137
  %v186 = vpop.f32.mrf.mxu0
  %v187 = vadd.f32 %v49, %v186
  %v188 = vpop.f32.mrf.mxu0
  %v189 = vadd.f32 %v49, %v188
  %190 = vmatmul.bf16.gmra.mxu0 %v140
  %v191 = vpop.f32.mrf.mxu0
  %v192 = vadd.f32 %v49, %v191
  %v193 = vpop.f32.mrf.mxu0
  %v194 = vadd.f32 %v49, %v193
  %195 = vmatmul.bf16.gmra.mxu0 %v143
  %v196 = vpop.f32.mrf.mxu0
  %v197 = vadd.f32 %v49, %v196
  %v198 = vpop.f32.mrf.mxu0
  %v199 = vadd.f32 %v49, %v198
  %200 = vdwg.mxu0
  %v201 = vmul.f32 %v162, %v162
  %v202 = vmul.f32 %v164, %v164
  %v203 = vmul.f32 %v167, %v167
  %v204 = vmul.f32 %v169, %v169
  %v205 = vmul.f32 %v172, %v172
  %v206 = vmul.f32 %v174, %v174
  %v207 = vmul.f32 %v177, %v177
  %v208 = vmul.f32 %v179, %v179
  %v209 = vmul.f32 %v182, %v182
  %v210 = vmul.f32 %v184, %v184
  %v211 = vmul.f32 %v187, %v187
  %v212 = vmul.f32 %v189, %v189
  %v213 = vmul.f32 %v192, %v192
  %v214 = vmul.f32 %v194, %v194
  %v215 = vmul.f32 %v197, %v197
  %v216 = vmul.f32 %v199, %v199
  %v217 = vld [vmem:[%s3] sm:$0xff]
  %v218 = vld [vmem:[%s4] sm:$0x1]
  %v220 = vperm.slane %v218, 0
  %vm222 = vcmask 64512
  %v224 = vsel %vm222, %v201, 0
  %v227 = vsel %vm222, %v202, 0
  %v230 = vsel %vm222, %v203, 0
  %v233 = vsel %vm222, %v204, 0
  %v236 = vsel %vm222, %v205, 0
  %v239 = vsel %vm222, %v206, 0
  %v242 = vsel %vm222, %v207, 0
  %v245 = vsel %vm222, %v208, 0
  %v248 = vsel %vm222, %v209, 0
  %v251 = vsel %vm222, %v210, 0
  %v254 = vsel %vm222, %v211, 0
  %v257 = vsel %vm222, %v212, 0
  %v260 = vsel %vm222, %v213, 0
  %v263 = vsel %vm222, %v214, 0
  %v266 = vsel %vm222, %v215, 0
  %v269 = vsel %vm222, %v216, 0
  %271 = vmatpush.msra.mxu0 0.0
  %272 = vmatpush.msra.mxu0 0.0
  %273 = vmatpush.msra.mxu0 0.0
  %274 = vmatpush.msra.mxu0 0.0
  %275 = vmatpush.msra.mxu0 0.0
  %276 = vmatpush.msra.mxu0 0.0
  %277 = vmatpush.msra.mxu0 0.0
  %278 = vmatpush.msra.mxu0 0.0
  %279 = vmatpush.msra.mxu0 0.0
  %280 = vmatpush.msra.mxu0 0.0
  %281 = vmatpush.msra.mxu0 0.0
  %282 = vmatpush.msra.mxu0 0.0
  %283 = vmatpush.msra.mxu0 0.0
  %284 = vmatpush.msra.mxu0 0.0
  %285 = vmatpush.msra.mxu0 0.0
  %286 = vmatpush.msra.mxu0 %v217
  %287 = vmatmul.f32.gmra.mxu0 %v224
  %v288 = vpop.f32.mrf.mxu0
  %v289 = vadd.f32 %v220, %v288
  %290 = vmatmul.f32.gmra.mxu0 %v227
  %v291 = vpop.f32.mrf.mxu0
  %v292 = vadd.f32 %v220, %v291
  %293 = vmatmul.f32.gmra.mxu0 %v230
  %v294 = vpop.f32.mrf.mxu0
  %v295 = vadd.f32 %v220, %v294
  %296 = vmatmul.f32.gmra.mxu0 %v233
  %v297 = vpop.f32.mrf.mxu0
  %v298 = vadd.f32 %v220, %v297
  %299 = vmatmul.f32.gmra.mxu0 %v236
  %v300 = vpop.f32.mrf.mxu0
  %v301 = vadd.f32 %v220, %v300
  %302 = vmatmul.f32.gmra.mxu0 %v239
  %v303 = vpop.f32.mrf.mxu0
  %v304 = vadd.f32 %v220, %v303
  %305 = vmatmul.f32.gmra.mxu0 %v242
  %v306 = vpop.f32.mrf.mxu0
  %v307 = vadd.f32 %v220, %v306
  %308 = vmatmul.f32.gmra.mxu0 %v245
  %v309 = vpop.f32.mrf.mxu0
  %v310 = vadd.f32 %v220, %v309
  %311 = vmatmul.f32.gmra.mxu0 %v248
  %v312 = vpop.f32.mrf.mxu0
  %v313 = vadd.f32 %v220, %v312
  %314 = vmatmul.f32.gmra.mxu0 %v251
  %v315 = vpop.f32.mrf.mxu0
  %v316 = vadd.f32 %v220, %v315
  %317 = vmatmul.f32.gmra.mxu0 %v254
  %v318 = vpop.f32.mrf.mxu0
  %v319 = vadd.f32 %v220, %v318
  %320 = vmatmul.f32.gmra.mxu0 %v257
  %v321 = vpop.f32.mrf.mxu0
  %v322 = vadd.f32 %v220, %v321
  %323 = vmatmul.f32.gmra.mxu0 %v260
  %v324 = vpop.f32.mrf.mxu0
  %v325 = vadd.f32 %v220, %v324
  %326 = vmatmul.f32.gmra.mxu0 %v263
  %v327 = vpop.f32.mrf.mxu0
  %v328 = vadd.f32 %v220, %v327
  %329 = vmatmul.f32.gmra.mxu0 %v266
  %v330 = vpop.f32.mrf.mxu0
  %v331 = vadd.f32 %v220, %v330
  %332 = vmatmul.f32.gmra.mxu0 %v269
  %v333 = vpop.f32.mrf.mxu0
  %v334 = vadd.f32 %v220, %v333
  %335 = vdwg.mxu0
  %v336 = vrsqrt.pop %v289
  %v337 = vmul.f32 %v336, %v289
  %v338 = vmul.f32 %v337, %v336
  %v339 = vmul.f32 0.5, %v338
  %v340 = vsub.f32 1.5, %v339
  %v341 = vmul.f32 %v336, %v340
  %vm342 = vweird.f32 %v289
  %vm343 = vweird.f32 %v336
  %vm344 = vmor %vm342, %vm343
  %v345 = vsel %vm344, %v336, %v341
  %v346 = vrsqrt.pop %v292
  %v347 = vmul.f32 %v346, %v292
  %v348 = vmul.f32 %v347, %v346
  %v349 = vmul.f32 0.5, %v348
  %v350 = vsub.f32 1.5, %v349
  %v351 = vmul.f32 %v346, %v350
  %vm352 = vweird.f32 %v292
  %vm353 = vweird.f32 %v346
  %vm354 = vmor %vm352, %vm353
  %v355 = vsel %vm354, %v346, %v351
  %v356 = vrsqrt.pop %v295
  %v357 = vmul.f32 %v356, %v295
  %v358 = vmul.f32 %v357, %v356
  %v359 = vmul.f32 0.5, %v358
  %v360 = vsub.f32 1.5, %v359
  %v361 = vmul.f32 %v356, %v360
  %vm362 = vweird.f32 %v295
  %vm363 = vweird.f32 %v356
  %vm364 = vmor %vm362, %vm363
  %v365 = vsel %vm364, %v356, %v361
  %v366 = vrsqrt.pop %v298
  %v367 = vmul.f32 %v366, %v298
  %v368 = vmul.f32 %v367, %v366
  %v369 = vmul.f32 0.5, %v368
  %v370 = vsub.f32 1.5, %v369
  %v371 = vmul.f32 %v366, %v370
  %vm372 = vweird.f32 %v298
  %vm373 = vweird.f32 %v366
  %vm374 = vmor %vm372, %vm373
  %v375 = vsel %vm374, %v366, %v371
  %v376 = vrsqrt.pop %v301
  %v377 = vmul.f32 %v376, %v301
  %v378 = vmul.f32 %v377, %v376
  %v379 = vmul.f32 0.5, %v378
  %v380 = vsub.f32 1.5, %v379
  %v381 = vmul.f32 %v376, %v380
  %vm382 = vweird.f32 %v301
  %vm383 = vweird.f32 %v376
  %vm384 = vmor %vm382, %vm383
  %v385 = vsel %vm384, %v376, %v381
  %v386 = vrsqrt.pop %v304
  %v387 = vmul.f32 %v386, %v304
  %v388 = vmul.f32 %v387, %v386
  %v389 = vmul.f32 0.5, %v388
  %v390 = vsub.f32 1.5, %v389
  %v391 = vmul.f32 %v386, %v390
  %vm392 = vweird.f32 %v304
  %vm393 = vweird.f32 %v386
  %vm394 = vmor %vm392, %vm393
  %v395 = vsel %vm394, %v386, %v391
  %v396 = vrsqrt.pop %v307
  %v397 = vmul.f32 %v396, %v307
  %v398 = vmul.f32 %v397, %v396
  %v399 = vmul.f32 0.5, %v398
  %v400 = vsub.f32 1.5, %v399
  %v401 = vmul.f32 %v396, %v400
  %vm402 = vweird.f32 %v307
  %vm403 = vweird.f32 %v396
  %vm404 = vmor %vm402, %vm403
  %v405 = vsel %vm404, %v396, %v401
  %v406 = vrsqrt.pop %v310
  %v407 = vmul.f32 %v406, %v310
  %v408 = vmul.f32 %v407, %v406
  %v409 = vmul.f32 0.5, %v408
  %v410 = vsub.f32 1.5, %v409
  %v411 = vmul.f32 %v406, %v410
  %vm412 = vweird.f32 %v310
  %vm413 = vweird.f32 %v406
  %vm414 = vmor %vm412, %vm413
  %v415 = vsel %vm414, %v406, %v411
  %v416 = vrsqrt.pop %v313
  %v417 = vmul.f32 %v416, %v313
  %v418 = vmul.f32 %v417, %v416
  %v419 = vmul.f32 0.5, %v418
  %v420 = vsub.f32 1.5, %v419
  %v421 = vmul.f32 %v416, %v420
  %vm422 = vweird.f32 %v313
  %vm423 = vweird.f32 %v416
  %vm424 = vmor %vm422, %vm423
  %v425 = vsel %vm424, %v416, %v421
  %v426 = vrsqrt.pop %v316
  %v427 = vmul.f32 %v426, %v316
  %v428 = vmul.f32 %v427, %v426
  %v429 = vmul.f32 0.5, %v428
  %v430 = vsub.f32 1.5, %v429
  %v431 = vmul.f32 %v426, %v430
  %vm432 = vweird.f32 %v316
  %vm433 = vweird.f32 %v426
  %vm434 = vmor %vm432, %vm433
  %v435 = vsel %vm434, %v426, %v431
  %v436 = vrsqrt.pop %v319
  %v437 = vmul.f32 %v436, %v319
  %v438 = vmul.f32 %v437, %v436
  %v439 = vmul.f32 0.5, %v438
  %v440 = vsub.f32 1.5, %v439
  %v441 = vmul.f32 %v436, %v440
  %vm442 = vweird.f32 %v319
  %vm443 = vweird.f32 %v436
  %vm444 = vmor %vm442, %vm443
  %v445 = vsel %vm444, %v436, %v441
  %v446 = vrsqrt.pop %v322
  %v447 = vmul.f32 %v446, %v322
  %v448 = vmul.f32 %v447, %v446
  %v449 = vmul.f32 0.5, %v448
  %v450 = vsub.f32 1.5, %v449
  %v451 = vmul.f32 %v446, %v450
  %vm452 = vweird.f32 %v322
  %vm453 = vweird.f32 %v446
  %vm454 = vmor %vm452, %vm453
  %v455 = vsel %vm454, %v446, %v451
  %v456 = vrsqrt.pop %v325
  %v457 = vmul.f32 %v456, %v325
  %v458 = vmul.f32 %v457, %v456
  %v459 = vmul.f32 0.5, %v458
  %v460 = vsub.f32 1.5, %v459
  %v461 = vmul.f32 %v456, %v460
  %vm462 = vweird.f32 %v325
  %vm463 = vweird.f32 %v456
  %vm464 = vmor %vm462, %vm463
  %v465 = vsel %vm464, %v456, %v461
  %v466 = vrsqrt.pop %v328
  %v467 = vmul.f32 %v466, %v328
  %v468 = vmul.f32 %v467, %v466
  %v469 = vmul.f32 0.5, %v468
  %v470 = vsub.f32 1.5, %v469
  %v471 = vmul.f32 %v466, %v470
  %vm472 = vweird.f32 %v328
  %vm473 = vweird.f32 %v466
  %vm474 = vmor %vm472, %vm473
  %v475 = vsel %vm474, %v466, %v471
  %v476 = vrsqrt.pop %v331
  %v477 = vmul.f32 %v476, %v331
  %v478 = vmul.f32 %v477, %v476
  %v479 = vmul.f32 0.5, %v478
  %v480 = vsub.f32 1.5, %v479
  %v481 = vmul.f32 %v476, %v480
  %vm482 = vweird.f32 %v331
  %vm483 = vweird.f32 %v476
  %vm484 = vmor %vm482, %vm483
  %v485 = vsel %vm484, %v476, %v481
  %v486 = vrsqrt.pop %v334
  %v487 = vmul.f32 %v486, %v334
  %v488 = vmul.f32 %v487, %v486
  %v489 = vmul.f32 0.5, %v488
  %v490 = vsub.f32 1.5, %v489
  %v491 = vmul.f32 %v486, %v490
  %vm492 = vweird.f32 %v334
  %vm493 = vweird.f32 %v486
  %vm494 = vmor %vm492, %vm493
  %v495 = vsel %vm494, %v486, %v491
  %v496 = vmul.f32 %v162, %v345
  %v497 = vmul.f32 %v164, %v355
  %v498 = vmul.f32 %v167, %v365
  %v499 = vmul.f32 %v169, %v375
  %v500 = vmul.f32 %v172, %v385
  %v501 = vmul.f32 %v174, %v395
  %v502 = vmul.f32 %v177, %v405
  %v503 = vmul.f32 %v179, %v415
  %v504 = vmul.f32 %v182, %v425
  %v505 = vmul.f32 %v184, %v435
  %v506 = vmul.f32 %v187, %v445
  %v507 = vmul.f32 %v189, %v455
  %v508 = vmul.f32 %v192, %v465
  %v509 = vmul.f32 %v194, %v475
  %v510 = vmul.f32 %v197, %v485
  %v511 = vmul.f32 %v199, %v495
  %512 = vst.msk [vmem:[%s5] sm:$0xff] %vm222, %v496
  %513 = vst.msk [vmem:[%s5 + $0x8] sm:$0xff] %vm222, %v497
  %514 = vst.msk [vmem:[%s5 + $0x10] sm:$0xff] %vm222, %v498
  %515 = vst.msk [vmem:[%s5 + $0x18] sm:$0xff] %vm222, %v499
  %516 = vst.msk [vmem:[%s5 + $0x20] sm:$0xff] %vm222, %v500
  %517 = vst.msk [vmem:[%s5 + $0x28] sm:$0xff] %vm222, %v501
  %518 = vst.msk [vmem:[%s5 + $0x30] sm:$0xff] %vm222, %v502
  %519 = vst.msk [vmem:[%s5 + $0x38] sm:$0xff] %vm222, %v503
  %520 = vst.msk [vmem:[%s5 + $0x40] sm:$0xff] %vm222, %v504
  %521 = vst.msk [vmem:[%s5 + $0x48] sm:$0xff] %vm222, %v505
  %522 = vst.msk [vmem:[%s5 + $0x50] sm:$0xff] %vm222, %v506
  %523 = vst.msk [vmem:[%s5 + $0x58] sm:$0xff] %vm222, %v507
  %524 = vst.msk [vmem:[%s5 + $0x60] sm:$0xff] %vm222, %v508
  %525 = vst.msk [vmem:[%s5 + $0x68] sm:$0xff] %vm222, %v509
  %526 = vst.msk [vmem:[%s5 + $0x70] sm:$0xff] %vm222, %v510
  %527 = vst.msk [vmem:[%s5 + $0x78] sm:$0xff] %vm222, %v511
  // Predicated region
  $region22: #{compressor2018_forward.11} parent=0 // pred_check
    _
  $region23: #{compressor2018_forward.11} parent=0 // pred_check_branch
    %529 = sbr.rel (0) target = $region25
  $region24: #{compressor2018_forward.11} parent=0 // pred_region
    _
  $region25: #{compressor2018_forward.11} parent=0 // pred_fallthru
    _
  // Predicated region
  $region26: #{compressor2018_forward.11} parent=0 // pred_check
    _
  $region27: #{compressor2018_forward.11} parent=0 // pred_check_branch
    %531 = sbr.rel (0) target = $region29
  $region28: #{compressor2018_forward.11} parent=0 // pred_region
    _
  $region29: #{compressor2018_forward.11} parent=0 // pred_fallthru
    _

// kernel: compressor2018_forward.12
$region0: #{compressor2018_forward.12}
  #allocation0 [shape = 'u32[]', space=smem, size = 0x4, offset = 0x4, fixed_abs, tag = 'smem constant byte address 0x4 - core index']
  #allocation1 [shape = 'u32[72,128]{1,0:T(1,128)}', space=vmem, size = 0x9000, scoped, tag = 'internal scratch']
  %s0 = inlined_call_operand.vmem [shape: bf16[32,200], index: 0, kind: input, shape index: {}]
  %s1 = inlined_call_operand.vmem [shape: bf16[200,8], index: 1, kind: input, shape index: {}]
  %s2 = inlined_call_operand.vmem [shape: f32[1,8], index: 2, kind: input, shape index: {}]
  %s3 = inlined_call_operand.vmem [shape: f32[32,8], index: 3, kind: output, shape index: {}]
  %s4 = sld [smem:[#allocation0]]
  $region22: #{compressor2018_forward.12} parent=0
    _
  %s6 = ssub.s32 1, %s4
  %s7 = scalar_select 0, %s6, %s4
  // Predicated region
  $region2: #{compressor2018_forward.12} parent=0 // pred_check
    _
  $region3: #{compressor2018_forward.12} parent=0 // pred_check_branch
    %9 = sbr.rel (0) target = $region5
  $region4: #{compressor2018_forward.12} parent=0 // pred_region
    _
  $region5: #{compressor2018_forward.12} parent=0 // pred_fallthru
    _
  // Predicated region
  $region6: #{compressor2018_forward.12} parent=0 // pred_check
    _
  $region7: #{compressor2018_forward.12} parent=0 // pred_check_branch
    %11 = sbr.rel (0) target = $region9
  $region8: #{compressor2018_forward.12} parent=0 // pred_region
    _
  $region9: #{compressor2018_forward.12} parent=0 // pred_fallthru
    _
  // Predicated region
  $region10: #{compressor2018_forward.12} parent=0 // pred_check
    _
  $region11: #{compressor2018_forward.12} parent=0 // pred_check_branch
    %13 = sbr.rel (0) target = $region13
  $region12: #{compressor2018_forward.12} parent=0 // pred_region
    _
  $region13: #{compressor2018_forward.12} parent=0 // pred_fallthru
    _
  %v15 = vld [vmem:[%s0] sm:$0xff]
  %v16 = vld [vmem:[%s0 + $0x8] sm:$0xff]
  %v17 = vld [vmem:[%s0 + $0x10] sm:$0xff]
  %v18 = vld [vmem:[%s0 + $0x18] sm:$0xff]
  %v19 = vld [vmem:[%s1] sm:$0xf]
  %v20 = vld [vmem:[%s1 + $0x4] sm:$0xf]
  %v21 = vld [vmem:[%s1 + $0x8] sm:$0xf]
  %v22 = vld [vmem:[%s1 + $0xc] sm:$0xf]
  %v23 = vld [vmem:[%s1 + $0x10] sm:$0xf]
  %v24 = vld [vmem:[%s1 + $0x14] sm:$0xf]
  %v25 = vld [vmem:[%s1 + $0x18] sm:$0xf]
  %v26 = vld [vmem:[%s1 + $0x1c] sm:$0xf]
  %v27 = vld [vmem:[%s1 + $0x20] sm:$0xf]
  %v28 = vld [vmem:[%s1 + $0x24] sm:$0xf]
  %v29 = vld [vmem:[%s1 + $0x28] sm:$0xf]
  %v30 = vld [vmem:[%s1 + $0x2c] sm:$0xf]
  %v31 = vld [vmem:[%s1 + $0x30] sm:$0xf]
  %v32 = vld [vmem:[%s1 + $0x34] sm:$0xf]
  %v33 = vld [vmem:[%s1 + $0x38] sm:$0xf]
  %v34 = vld [vmem:[%s1 + $0x3c] sm:$0xf]
  %v35 = vld [vmem:[%s1 + $0x40] sm:$0xf]
  %v36 = vld [vmem:[%s1 + $0x44] sm:$0xf]
  %v37 = vld [vmem:[%s1 + $0x48] sm:$0xf]
  %v38 = vld [vmem:[%s1 + $0x4c] sm:$0xf]
  %v39 = vld [vmem:[%s1 + $0x50] sm:$0xf]
  %v40 = vld [vmem:[%s1 + $0x54] sm:$0xf]
  %v41 = vld [vmem:[%s1 + $0x58] sm:$0xf]
  %v42 = vld [vmem:[%s1 + $0x5c] sm:$0xf]
  %v43 = vld [vmem:[%s1 + $0x60] sm:$0xf]
  %v44 = vld [vmem:[%s2] sm:$0x1]
  %v46 = vperm.slane %v44, 0
  %v52 = vunpack.c.l.b16 %v15
  %v53 = vunpack.c.h.b16 %v15
  %v54 = vunpack.c.l.b16 %v16
  %v55 = vunpack.c.h.b16 %v16
  %v56 = vunpack.c.l.b16 %v17
  %v57 = vunpack.c.h.b16 %v17
  %v58 = vunpack.c.l.b16 %v18
  %v59 = vunpack.c.h.b16 %v18
  %v60 = vpack.c.b16 %v54, %v52
  %v61 = vpack.c.b16 %v55, %v53
  %v62 = vpack.c.b16 %v58, %v56
  %v63 = vpack.c.b16 %v59, %v57
  %v91 = vunpack.c.l.b16 %v19
  %v92 = vunpack.c.l.b16 %v20
  %v93 = vunpack.c.l.b16 %v21
  %v94 = vunpack.c.l.b16 %v22
  %v95 = vunpack.c.l.b16 %v23
  %v96 = vunpack.c.l.b16 %v24
  %v97 = vunpack.c.l.b16 %v25
  %v98 = vunpack.c.l.b16 %v26
  %v99 = vunpack.c.l.b16 %v27
  %v100 = vunpack.c.l.b16 %v28
  %v101 = vunpack.c.l.b16 %v29
  %v102 = vunpack.c.l.b16 %v30
  %v103 = vunpack.c.l.b16 %v31
  %v104 = vunpack.c.l.b16 %v32
  %v105 = vunpack.c.l.b16 %v33
  %v106 = vunpack.c.l.b16 %v34
  %v107 = vunpack.c.l.b16 %v35
  %v108 = vunpack.c.l.b16 %v36
  %v109 = vunpack.c.l.b16 %v37
  %v110 = vunpack.c.l.b16 %v38
  %v111 = vunpack.c.l.b16 %v39
  %v112 = vunpack.c.l.b16 %v40
  %v113 = vunpack.c.l.b16 %v41
  %v114 = vunpack.c.l.b16 %v42
  %v115 = vunpack.c.l.b16 %v43
  %v116 = vpack.c.b16 %v92, %v91
  %v117 = vpack.c.b16 %v94, %v93
  %v118 = vpack.c.b16 %v96, %v95
  %v119 = vpack.c.b16 %v98, %v97
  %v120 = vpack.c.b16 %v100, %v99
  %v121 = vpack.c.b16 %v102, %v101
  %v122 = vpack.c.b16 %v104, %v103
  %v123 = vpack.c.b16 %v106, %v105
  %v124 = vpack.c.b16 %v108, %v107
  %v125 = vpack.c.b16 %v110, %v109
  %v126 = vpack.c.b16 %v112, %v111
  %v127 = vpack.c.b16 %v114, %v113
  %v128 = vpack.c.b16 %v115, %v115
  %vm141 = vcmask 588800
  %v143 = vsel %vm141, %v61, 0
  %v146 = vsel %vm141, %v63, 0
  %vm148 = vcmask 1043456
  %v150 = vsel %vm148, %v128, 0
  %152 = vmatpush.bf16.msra.mxu0 %v123
  %153 = vmatpush.bf16.msra.mxu0 %v122
  %154 = vmatpush.bf16.msra.mxu0 %v121
  %155 = vmatpush.bf16.msra.mxu0 %v120
  %156 = vmatpush.bf16.msra.mxu0 %v119
  %157 = vmatpush.bf16.msra.mxu0 %v118
  %158 = vmatpush.bf16.msra.mxu0 %v117
  %159 = vmatpush.bf16.msra.mxu0 %v116
  %160 = vmatmul.bf16.gmra.mxu0 %v60
  %v161 = vpop.f32.mrf.mxu0
  %v162 = vadd.f32 %v46, %v161
  %v163 = vpop.f32.mrf.mxu0
  %v164 = vadd.f32 %v46, %v163
  %165 = vmatmul.bf16.gmra.mxu0 %v62
  %v166 = vpop.f32.mrf.mxu0
  %v167 = vadd.f32 %v46, %v166
  %v168 = vpop.f32.mrf.mxu0
  %v169 = vadd.f32 %v46, %v168
  %170 = vdwg.mxu0
  %171 = vmatpush.bf16.msra.mxu0 0
  %172 = vmatpush.bf16.msra.mxu0 0
  %173 = vmatpush.bf16.msra.mxu0 0
  %174 = vmatpush.bf16.msra.mxu0 %v150
  %175 = vmatpush.bf16.msra.mxu0 %v127
  %176 = vmatpush.bf16.msra.mxu0 %v126
  %177 = vmatpush.bf16.msra.mxu0 %v125
  %178 = vmatpush.bf16.msra.mxu0 %v124
  %179 = vmatmul.bf16.gmra.mxu0 %v143
  %v180 = vpop.f32.mrf.mxu0
  %v181 = vadd.f32 %v162, %v180
  %v182 = vpop.f32.mrf.mxu0
  %v183 = vadd.f32 %v164, %v182
  %184 = vmatmul.bf16.gmra.mxu0 %v146
  %v185 = vpop.f32.mrf.mxu0
  %v186 = vadd.f32 %v167, %v185
  %v187 = vpop.f32.mrf.mxu0
  %v188 = vadd.f32 %v169, %v187
  %189 = vdwg.mxu0
  %vm190 = vcmask 64512
  %191 = vst.msk [vmem:[%s3] sm:$0xff] %vm190, %v181
  %192 = vst.msk [vmem:[%s3 + $0x8] sm:$0xff] %vm190, %v183
  %193 = vst.msk [vmem:[%s3 + $0x10] sm:$0xff] %vm190, %v186
  %194 = vst.msk [vmem:[%s3 + $0x18] sm:$0xff] %vm190, %v188
  // Predicated region
  $region14: #{compressor2018_forward.12} parent=0 // pred_check
    _
  $region15: #{compressor2018_forward.12} parent=0 // pred_check_branch
    %196 = sbr.rel (0) target = $region17
  $region16: #{compressor2018_forward.12} parent=0 // pred_region
    _
  $region17: #{compressor2018_forward.12} parent=0 // pred_fallthru
    _
  // Predicated region
  $region18: #{compressor2018_forward.12} parent=0 // pred_check
    _
  $region19: #{compressor2018_forward.12} parent=0 // pred_check_branch
    %198 = sbr.rel (0) target = $region21
  $region20: #{compressor2018_forward.12} parent=0 // pred_region
    _
  $region21: #{compressor2018_forward.12} parent=0 // pred_fallthru
    _

// kernel: compressor2018_forward.13
$region0: #{compressor2018_forward.13}
  #allocation0 [shape = 'u32[]', space=smem, size = 0x4, offset = 0x4, fixed_abs, tag = 'smem constant byte address 0x4 - core index']
  #allocation1 [shape = 'u32[72,128]{1,0:T(1,128)}', space=vmem, size = 0x9000, scoped, tag = 'internal scratch']
  %s0 = inlined_call_operand.vmem [shape: bf16[32,72], index: 0, kind: input, shape index: {}]
  %s1 = inlined_call_operand.vmem [shape: bf16[72,4], index: 1, kind: input, shape index: {}]
  %s2 = inlined_call_operand.vmem [shape: f32[1,4], index: 2, kind: input, shape index: {}]
  %s3 = inlined_call_operand.vmem [shape: f32[32,4], index: 3, kind: output, shape index: {}]
  %s4 = sld [smem:[#allocation0]]
  $region22: #{compressor2018_forward.13} parent=0
    _
  %s6 = ssub.s32 1, %s4
  %s7 = scalar_select 0, %s6, %s4
  // Predicated region
  $region2: #{compressor2018_forward.13} parent=0 // pred_check
    _
  $region3: #{compressor2018_forward.13} parent=0 // pred_check_branch
    %9 = sbr.rel (0) target = $region5
  $region4: #{compressor2018_forward.13} parent=0 // pred_region
    _
  $region5: #{compressor2018_forward.13} parent=0 // pred_fallthru
    _
  // Predicated region
  $region6: #{compressor2018_forward.13} parent=0 // pred_check
    _
  $region7: #{compressor2018_forward.13} parent=0 // pred_check_branch
    %11 = sbr.rel (0) target = $region9
  $region8: #{compressor2018_forward.13} parent=0 // pred_region
    _
  $region9: #{compressor2018_forward.13} parent=0 // pred_fallthru
    _
  // Predicated region
  $region10: #{compressor2018_forward.13} parent=0 // pred_check
    _
  $region11: #{compressor2018_forward.13} parent=0 // pred_check_branch
    %13 = sbr.rel (0) target = $region13
  $region12: #{compressor2018_forward.13} parent=0 // pred_region
    _
  $region13: #{compressor2018_forward.13} parent=0 // pred_fallthru
    _
  %v15 = vld [vmem:[%s0] sm:$0xf]
  %v16 = vld [vmem:[%s0 + $0x4] sm:$0xf]
  %v17 = vld [vmem:[%s0 + $0x8] sm:$0xf]
  %v18 = vld [vmem:[%s0 + $0xc] sm:$0xf]
  %v19 = vand.u32 2147450879, %v15
  %v20 = vand.u32 2147450879, %v16
  %v21 = vand.u32 2147450879, %v17
  %v22 = vand.u32 2147450879, %v18
  %v23 = vld [vmem:[%s1] sm:$0xf]
  %v24 = vld [vmem:[%s1 + $0x4] sm:$0xf]
  %v25 = vld [vmem:[%s1 + $0x8] sm:$0xf]
  %v26 = vld [vmem:[%s1 + $0xc] sm:$0xf]
  %v27 = vld [vmem:[%s1 + $0x10] sm:$0xf]
  %v28 = vld [vmem:[%s1 + $0x14] sm:$0xf]
  %v29 = vld [vmem:[%s1 + $0x18] sm:$0xf]
  %v30 = vld [vmem:[%s1 + $0x1c] sm:$0xf]
  %v31 = vld [vmem:[%s1 + $0x20] sm:$0xf]
  %v32 = vld [vmem:[%s2] sm:$0x1]
  %v34 = vperm.slane %v32, 0
  %v40 = vunpack.c.l.b16 %v19
  %v41 = vunpack.c.l.b16 %v20
  %v42 = vunpack.c.l.b16 %v21
  %v43 = vunpack.c.l.b16 %v22
  %v44 = vpack.c.b16 %v41, %v40
  %v45 = vpack.c.b16 %v43, %v42
  %v55 = vunpack.c.l.b16 %v23
  %v56 = vunpack.c.l.b16 %v24
  %v57 = vunpack.c.l.b16 %v25
  %v58 = vunpack.c.l.b16 %v26
  %v59 = vunpack.c.l.b16 %v27
  %v60 = vunpack.c.l.b16 %v28
  %v61 = vunpack.c.l.b16 %v29
  %v62 = vunpack.c.l.b16 %v30
  %v63 = vunpack.c.l.b16 %v31
  %v64 = vpack.c.b16 %v56, %v55
  %v65 = vpack.c.b16 %v58, %v57
  %v66 = vpack.c.b16 %v60, %v59
  %v67 = vpack.c.b16 %v62, %v61
  %v68 = vpack.c.b16 %v63, %v63
  %vm73 = vcmask 588800
  %v75 = vsel %vm73, %v44, 0
  %v78 = vsel %vm73, %v45, 0
  %vm80 = vcmask 1043456
  %v82 = vsel %vm80, %v68, 0
  %84 = vmatpush.bf16.msra.mxu0 0
  %85 = vmatpush.bf16.msra.mxu0 0
  %86 = vmatpush.bf16.msra.mxu0 0
  %87 = vmatpush.bf16.msra.mxu0 %v82
  %88 = vmatpush.bf16.msra.mxu0 %v67
  %89 = vmatpush.bf16.msra.mxu0 %v66
  %90 = vmatpush.bf16.msra.mxu0 %v65
  %91 = vmatpush.bf16.msra.mxu0 %v64
  %92 = vmatmul.bf16.gmra.mxu0 %v75
  %v93 = vpop.f32.mrf.mxu0
  %v94 = vadd.f32 %v34, %v93
  %v95 = vpop.f32.mrf.mxu0
  %v96 = vadd.f32 %v34, %v95
  %97 = vmatmul.bf16.gmra.mxu0 %v78
  %v98 = vpop.f32.mrf.mxu0
  %v99 = vadd.f32 %v34, %v98
  %v100 = vpop.f32.mrf.mxu0
  %v101 = vadd.f32 %v34, %v100
  %102 = vdwg.mxu0
  %v103 = vmax.f32 %v94, 0.0
  %v104 = vmax.f32 %v96, 0.0
  %v105 = vmax.f32 %v99, 0.0
  %v106 = vmax.f32 %v101, 0.0
  %vm107 = vcmask 31744
  %108 = vst.msk [vmem:[%s3] sm:$0xff] %vm107, %v103
  %109 = vst.msk [vmem:[%s3 + $0x8] sm:$0xff] %vm107, %v104
  %110 = vst.msk [vmem:[%s3 + $0x10] sm:$0xff] %vm107, %v105
  %111 = vst.msk [vmem:[%s3 + $0x18] sm:$0xff] %vm107, %v106
  // Predicated region
  $region14: #{compressor2018_forward.13} parent=0 // pred_check
    _
  $region15: #{compressor2018_forward.13} parent=0 // pred_check_branch
    %113 = sbr.rel (0) target = $region17
  $region16: #{compressor2018_forward.13} parent=0 // pred_region
    _
  $region17: #{compressor2018_forward.13} parent=0 // pred_fallthru
    _
  // Predicated region
  $region18: #{compressor2018_forward.13} parent=0 // pred_check
    _
  $region19: #{compressor2018_forward.13} parent=0 // pred_check_branch
    %115 = sbr.rel (0) target = $region21
  $region20: #{compressor2018_forward.13} parent=0 // pred_region
    _
  $region21: #{compressor2018_forward.13} parent=0 // pred_fallthru
    _

// kernel: compressor2018_forward.15
$region0: #{compressor2018_forward.15}
  #allocation0 [shape = 'u32[]', space=smem, size = 0x4, offset = 0x4, fixed_abs, tag = 'smem constant byte address 0x4 - core index']
  #allocation1 [shape = 'u32[72,128]{1,0:T(1,128)}', space=vmem, size = 0x9000, scoped, tag = 'internal scratch']
  %s0 = inlined_call_operand.vmem [shape: f32[8,128], index: 0, kind: input, shape index: {}]
  %s1 = inlined_call_operand.vmem [shape: f32[8,128], index: 1, kind: input, shape index: {}]
  %s2 = inlined_call_operand.vmem [shape: f32[8,128], index: 2, kind: input, shape index: {}]
  %s3 = inlined_call_operand.vmem [shape: f32[8,128], index: 3, kind: input, shape index: {}]
  %s4 = inlined_call_operand.vmem [shape: f32[8,128], index: 4, kind: input, shape index: {}]
  %s5 = inlined_call_operand.vmem [shape: f32[8,128], index: 5, kind: output, shape index: {0}]
  %s6 = inlined_call_operand.hbm [shape: f32[1,1], index: 6, kind: output, shape index: {1}]
  %7 = xla_tuple %s5, %s6
  %s8 = sld [smem:[#allocation0]]
  $region38: #{compressor2018_forward.15} parent=0
    _
  %s10 = ssub.s32 1, %s8
  %s11 = scalar_select 0, %s10, %s8
  $region1: #{compressor2018_forward.15} parent=0
    #allocation2 [shape = 'u8[512]{0}', space=smem, size = 0x200, scoped, tag = 'output window, operand 1, single buffered']
    #allocation3 [shape = 's32[1]{0}', space=sflag, size = 0x4, scoped, tag = 'scoped memory for compressor2018_forward.15']
    %12 = vsyncpa [#allocation3], 0
    // Predicated region
    $region2: #{compressor2018_forward.15} parent=1 // pred_check
      _
    $region3: #{compressor2018_forward.15} parent=1 // pred_check_branch
      %14 = sbr.rel (0) target = $region5
    $region4: #{compressor2018_forward.15} parent=1 // pred_region
      _
    $region5: #{compressor2018_forward.15} parent=1 // pred_fallthru
      _
    // Predicated region
    $region6: #{compressor2018_forward.15} parent=1 // pred_check
      _
    $region7: #{compressor2018_forward.15} parent=1 // pred_check_branch
      %16 = sbr.rel (0) target = $region9
    $region8: #{compressor2018_forward.15} parent=1 // pred_region
      _
    $region9: #{compressor2018_forward.15} parent=1 // pred_fallthru
      _
    // Predicated region
    $region10: #{compressor2018_forward.15} parent=1 // pred_check
      _
    $region11: #{compressor2018_forward.15} parent=1 // pred_check_branch
      %18 = sbr.rel (0) target = $region13
    $region12: #{compressor2018_forward.15} parent=1 // pred_region
      _
    $region13: #{compressor2018_forward.15} parent=1 // pred_fallthru
      _
    // Predicated region
    $region14: #{compressor2018_forward.15} parent=1 // pred_check
      _
    $region15: #{compressor2018_forward.15} parent=1 // pred_check_branch
      %20 = sbr.rel (0) target = $region17
    $region16: #{compressor2018_forward.15} parent=1 // pred_region
      _
    $region17: #{compressor2018_forward.15} parent=1 // pred_fallthru
      _
    // Predicated region
    $region18: #{compressor2018_forward.15} parent=1 // pred_check
      _
    $region19: #{compressor2018_forward.15} parent=1 // pred_check_branch
      %22 = sbr.rel (0) target = $region21
    $region20: #{compressor2018_forward.15} parent=1 // pred_region
      _
    $region21: #{compressor2018_forward.15} parent=1 // pred_fallthru
      _
    %v23 = vld [vmem:[%s0] sm:$0xff]
    %v24 = vld [vmem:[%s1] sm:$0xff]
    %v25 = vadd.f32 %v23, %v24
    %26 = vst [vmem:[%s5] sm:$0xff] %v25
    %v27 = vadd.f32 %v25, 0.5
    %v28 = vld [vmem:[%s2] sm:$0xff]
    %v29 = vsub.f32 %v27, %v28
    %v30 = vld [vmem:[%s3] sm:$0xff]
    %v31 = vmul.f32 %v29, %v30
    %v32 = vsub.f32 0.0, %v31
    %v33 = vmul.f32 %v32, 1.442695
    %v34 = vpow.pop %v33
    %v35 = vadd.f32 %v34, 1.0
    %v36 = vrcp.pop %v35
    %v37 = vmul.f32 %v35, %v36
    %v38 = vsub.f32 1.0, %v37
    %v39 = vmul.f32 %v36, %v38
    %v40 = vadd.f32 %v36, %v39
    %vm41 = vweird.f32 %v35
    %vm42 = vweird.f32 %v36
    %vm43 = vmor %vm41, %vm42
    %v44 = vsel %vm43, %v36, %v40
    %v45 = vand.u32 2147483647, %v35
    %vm46 = vcmp.eq.f32.partialorder %v45, 8.507059e+37
    %v47 = vand.u32 %v35, 2147483648
    %v48 = vor.u32 1.1754944e-38, %v47
    %v49 = vsel %vm46, %v48, %v44
    %v50 = vmul.f32 1.0, %v49
    %v51 = vsub.f32 %v25, 0.5
    %v52 = vsub.f32 %v51, %v28
    %v53 = vmul.f32 %v52, %v30
    %v54 = vsub.f32 0.0, %v53
    %v55 = vmul.f32 %v54, 1.442695
    %v56 = vpow.pop %v55
    %v57 = vadd.f32 %v56, 1.0
    %v58 = vrcp.pop %v57
    %v59 = vmul.f32 %v57, %v58
    %v60 = vsub.f32 1.0, %v59
    %v61 = vmul.f32 %v58, %v60
    %v62 = vadd.f32 %v58, %v61
    %vm63 = vweird.f32 %v57
    %vm64 = vweird.f32 %v58
    %vm65 = vmor %vm63, %vm64
    %v66 = vsel %vm65, %v58, %v62
    %v67 = vand.u32 2147483647, %v57
    %vm68 = vcmp.eq.f32.partialorder %v67, 8.507059e+37
    %v69 = vand.u32 %v57, 2147483648
    %v70 = vor.u32 1.1754944e-38, %v69
    %v71 = vsel %vm68, %v70, %v66
    %v72 = vmul.f32 1.0, %v71
    %v73 = vsub.f32 %v50, %v72
    %v74 = vmax.f32 %v73, 1e-09
    %v75 = vlog2.pop %v74
    %v76 = vmul.f32 %v75, 0.6931472
    %v77 = vsub.f32 0.0, %v76
    %v78 = vld [vmem:[%s4] sm:$0xff]
    %v79 = vmul.f32 %v77, %v78
    %80 = vadd.xlane.f32.xlu0 %v79
    %v81 = vpop.xlane.xlu0 %80
    %v82 = vrot.slane %v81, 4
    %v83 = vadd.f32 %v81, %v82
    %v84 = vrot.slane %v83, 2
    %v85 = vadd.f32 %v83, %v84
    %v86 = vrot.slane %v85, 1
    %v87 = vadd.f32 %v85, %v86
    %s88 = vtos %v87
    %s89 = smul.f32 %s88, 1.442695
    %s90 = scalar_lea.smem [#allocation2], 0
    %91 = sst [smem:[%s90]] %s89
    // Predicated region
    $region22: #{compressor2018_forward.15} parent=1 // pred_check
      _
    $region23: #{compressor2018_forward.15} parent=1 // pred_check_branch
      %93 = sbr.rel (0) target = $region25
    $region24: #{compressor2018_forward.15} parent=1 // pred_region
      _
    $region25: #{compressor2018_forward.15} parent=1 // pred_fallthru
      _
    // Predicated region
    $region26: #{compressor2018_forward.15} parent=1 // pred_check
      _
    $region27: #{compressor2018_forward.15} parent=1 // pred_check_branch
      %95 = sbr.rel (0) target = $region29
    $region28: #{compressor2018_forward.15} parent=1 // pred_region
      %97 = vsyncadd [#allocation3], 0
      %s99 = sshll.u32 %s6, 4
      %s100 = int_to_ptr.hbm [resolvable:$true] %s99
      %102 = dma.smem_to_hbm [#allocation2], 16, %s100, [#allocation3]
    $region29: #{compressor2018_forward.15} parent=1 // pred_fallthru
      _
    // Predicated region
    $region30: #{compressor2018_forward.15} parent=1 // pred_check
      _
    $region31: #{compressor2018_forward.15} parent=1 // pred_check_branch
      %104 = sbr.rel (0) target = $region33
    $region32: #{compressor2018_forward.15} parent=1 // pred_region
      _
    $region33: #{compressor2018_forward.15} parent=1 // pred_fallthru
      _
    // Predicated region
    $region34: #{compressor2018_forward.15} parent=1 // pred_check
      _
    $region35: #{compressor2018_forward.15} parent=1 // pred_check_branch
      %106 = sbr.rel (0) target = $region37
    $region36: #{compressor2018_forward.15} parent=1 // pred_region
      %108 = dma.done [#allocation3], 16
    $region37: #{compressor2018_forward.15} parent=1 // pred_fallthru
      _
    %109 = sfence
    %110 = vsyncpa [#allocation3], 1

// kernel: compressor2018_forward.14
$region0: #{compressor2018_forward.14}
  #allocation0 [shape = 'u32[]', space=smem, size = 0x4, offset = 0x4, fixed_abs, tag = 'smem constant byte address 0x4 - core index']
  #allocation1 [shape = 'u32[72,128]{1,0:T(1,128)}', space=vmem, size = 0x9000, scoped, tag = 'internal scratch']
  %s0 = inlined_call_operand.vmem [shape: bf16[8,100], index: 0, kind: input, shape index: {}]
  %s1 = inlined_call_operand.vmem [shape: bf16[100,4], index: 1, kind: input, shape index: {}]
  %s2 = inlined_call_operand.vmem [shape: f32[1,4], index: 2, kind: input, shape index: {}]
  %s3 = inlined_call_operand.vmem [shape: f32[8,4], index: 3, kind: output, shape index: {}]
  %s4 = sld [smem:[#allocation0]]
  $region22: #{compressor2018_forward.14} parent=0
    _
  %s6 = ssub.s32 1, %s4
  %s7 = scalar_select 0, %s6, %s4
  // Predicated region
  $region2: #{compressor2018_forward.14} parent=0 // pred_check
    _
  $region3: #{compressor2018_forward.14} parent=0 // pred_check_branch
    %9 = sbr.rel (0) target = $region5
  $region4: #{compressor2018_forward.14} parent=0 // pred_region
    _
  $region5: #{compressor2018_forward.14} parent=0 // pred_fallthru
    _
  // Predicated region
  $region6: #{compressor2018_forward.14} parent=0 // pred_check
    _
  $region7: #{compressor2018_forward.14} parent=0 // pred_check_branch
    %11 = sbr.rel (0) target = $region9
  $region8: #{compressor2018_forward.14} parent=0 // pred_region
    _
  $region9: #{compressor2018_forward.14} parent=0 // pred_fallthru
    _
  // Predicated region
  $region10: #{compressor2018_forward.14} parent=0 // pred_check
    _
  $region11: #{compressor2018_forward.14} parent=0 // pred_check_branch
    %13 = sbr.rel (0) target = $region13
  $region12: #{compressor2018_forward.14} parent=0 // pred_region
    _
  $region13: #{compressor2018_forward.14} parent=0 // pred_fallthru
    _
  %v15 = vld [vmem:[%s0] sm:$0xf]
  %v16 = vld [vmem:[%s1] sm:$0xf]
  %v17 = vld [vmem:[%s1 + $0x4] sm:$0xf]
  %v18 = vld [vmem:[%s1 + $0x8] sm:$0xf]
  %v19 = vld [vmem:[%s1 + $0xc] sm:$0xf]
  %v20 = vld [vmem:[%s1 + $0x10] sm:$0xf]
  %v21 = vld [vmem:[%s1 + $0x14] sm:$0xf]
  %v22 = vld [vmem:[%s1 + $0x18] sm:$0xf]
  %v23 = vld [vmem:[%s1 + $0x1c] sm:$0xf]
  %v24 = vld [vmem:[%s1 + $0x20] sm:$0xf]
  %v25 = vld [vmem:[%s1 + $0x24] sm:$0xf]
  %v26 = vld [vmem:[%s1 + $0x28] sm:$0xf]
  %v27 = vld [vmem:[%s1 + $0x2c] sm:$0xf]
  %v28 = vld [vmem:[%s1 + $0x30] sm:$0x3]
  %v29 = vld [vmem:[%s2] sm:$0x1]
  %v31 = vperm.slane %v29, 0
  %v46 = vunpack.c.l.b16 %v16
  %v47 = vunpack.c.l.b16 %v17
  %v48 = vunpack.c.l.b16 %v18
  %v49 = vunpack.c.l.b16 %v19
  %v50 = vunpack.c.l.b16 %v20
  %v51 = vunpack.c.l.b16 %v21
  %v52 = vunpack.c.l.b16 %v22
  %v53 = vunpack.c.l.b16 %v23
  %v54 = vunpack.c.l.b16 %v24
  %v55 = vunpack.c.l.b16 %v25
  %v56 = vunpack.c.l.b16 %v26
  %v57 = vunpack.c.l.b16 %v27
  %v58 = vunpack.c.l.b16 %v28
  %v59 = vpack.c.b16 %v47, %v46
  %v60 = vpack.c.b16 %v49, %v48
  %v61 = vpack.c.b16 %v51, %v50
  %v62 = vpack.c.b16 %v53, %v52
  %v63 = vpack.c.b16 %v55, %v54
  %v64 = vpack.c.b16 %v57, %v56
  %v65 = vpack.c.b16 %v58, %v58
  %vm72 = vcmask 818176
  %v74 = vsel %vm72, %v15, 0
  %vm76 = vcmask 1041408
  %v78 = vsel %vm76, %v65, 0
  %80 = vmatpush.bf16.msra.mxu0 0
  %81 = vmatpush.bf16.msra.mxu0 %v78
  %82 = vmatpush.bf16.msra.mxu0 %v64
  %83 = vmatpush.bf16.msra.mxu0 %v63
  %84 = vmatpush.bf16.msra.mxu0 %v62
  %85 = vmatpush.bf16.msra.mxu0 %v61
  %86 = vmatpush.bf16.msra.mxu0 %v60
  %87 = vmatpush.bf16.msra.mxu0 %v59
  %88 = vmatmul.bf16.gmra.mxu0 %v74
  %v89 = vpop.f32.mrf.mxu0
  %v90 = vadd.f32 %v31, %v89
  %v91 = vpop.f32.mrf.mxu0
  %92 = vdwg.mxu0
  %vm93 = vcmask 31744
  %94 = vst.msk [vmem:[%s3] sm:$0xff] %vm93, %v90
  // Predicated region
  $region14: #{compressor2018_forward.14} parent=0 // pred_check
    _
  $region15: #{compressor2018_forward.14} parent=0 // pred_check_branch
    %96 = sbr.rel (0) target = $region17
  $region16: #{compressor2018_forward.14} parent=0 // pred_region
    _
  $region17: #{compressor2018_forward.14} parent=0 // pred_fallthru
    _
  // Predicated region
  $region18: #{compressor2018_forward.14} parent=0 // pred_check
    _
  $region19: #{compressor2018_forward.14} parent=0 // pred_check_branch
    %98 = sbr.rel (0) target = $region21
  $region20: #{compressor2018_forward.14} parent=0 // pred_region
    _
  $region21: #{compressor2018_forward.14} parent=0 // pred_fallthru
    _

// kernel: compressor2018_forward.16
$region0: #{compressor2018_forward.16}
  #allocation0 [shape = 'u32[]', space=smem, size = 0x4, offset = 0x4, fixed_abs, tag = 'smem constant byte address 0x4 - core index']
  #allocation1 [shape = 'u32[72,128]{1,0:T(1,128)}', space=vmem, size = 0x9000, scoped, tag = 'internal scratch']
  %s0 = inlined_call_operand.vmem [shape: bf16[8,36], index: 0, kind: input, shape index: {}]
  %s1 = inlined_call_operand.vmem [shape: bf16[36,32], index: 1, kind: input, shape index: {}]
  %s2 = inlined_call_operand.vmem [shape: f32[1,32], index: 2, kind: input, shape index: {}]
  %s3 = inlined_call_operand.vmem [shape: f32[8,32], index: 3, kind: output, shape index: {}]
  %s4 = sld [smem:[#allocation0]]
  $region22: #{compressor2018_forward.16} parent=0
    _
  %s6 = ssub.s32 1, %s4
  %s7 = scalar_select 0, %s6, %s4
  // Predicated region
  $region2: #{compressor2018_forward.16} parent=0 // pred_check
    _
  $region3: #{compressor2018_forward.16} parent=0 // pred_check_branch
    %9 = sbr.rel (0) target = $region5
  $region4: #{compressor2018_forward.16} parent=0 // pred_region
    _
  $region5: #{compressor2018_forward.16} parent=0 // pred_fallthru
    _
  // Predicated region
  $region6: #{compressor2018_forward.16} parent=0 // pred_check
    _
  $region7: #{compressor2018_forward.16} parent=0 // pred_check_branch
    %11 = sbr.rel (0) target = $region9
  $region8: #{compressor2018_forward.16} parent=0 // pred_region
    _
  $region9: #{compressor2018_forward.16} parent=0 // pred_fallthru
    _
  // Predicated region
  $region10: #{compressor2018_forward.16} parent=0 // pred_check
    _
  $region11: #{compressor2018_forward.16} parent=0 // pred_check_branch
    %13 = sbr.rel (0) target = $region13
  $region12: #{compressor2018_forward.16} parent=0 // pred_region
    _
  $region13: #{compressor2018_forward.16} parent=0 // pred_fallthru
    _
  %v15 = vld [vmem:[%s0] sm:$0xf]
  %v16 = vld [vmem:[%s1] sm:$0xf]
  %v17 = vld [vmem:[%s1 + $0x4] sm:$0xf]
  %v18 = vld [vmem:[%s1 + $0x8] sm:$0xf]
  %v19 = vld [vmem:[%s1 + $0xc] sm:$0xf]
  %v20 = vld [vmem:[%s1 + $0x10] sm:$0x3]
  %v21 = vld [vmem:[%s2] sm:$0x1]
  %v23 = vperm.slane %v21, 0
  %v30 = vunpack.c.l.b16 %v16
  %v31 = vunpack.c.l.b16 %v17
  %v32 = vunpack.c.l.b16 %v18
  %v33 = vunpack.c.l.b16 %v19
  %v34 = vunpack.c.l.b16 %v20
  %v35 = vpack.c.b16 %v31, %v30
  %v36 = vpack.c.b16 %v33, %v32
  %v37 = vpack.c.b16 %v34, %v34
  %vm40 = vcmask 293888
  %v42 = vsel %vm40, %v15, 0
  %vm44 = vcmask 1041408
  %v46 = vsel %vm44, %v37, 0
  %48 = vmatpush.bf16.msra.mxu0 0
  %49 = vmatpush.bf16.msra.mxu0 0
  %50 = vmatpush.bf16.msra.mxu0 0
  %51 = vmatpush.bf16.msra.mxu0 0
  %52 = vmatpush.bf16.msra.mxu0 0
  %53 = vmatpush.bf16.msra.mxu0 %v46
  %54 = vmatpush.bf16.msra.mxu0 %v36
  %55 = vmatpush.bf16.msra.mxu0 %v35
  %56 = vmatmul.bf16.gmra.mxu0 %v42
  %v57 = vpop.f32.mrf.mxu0
  %v58 = vadd.f32 %v23, %v57
  %v59 = vpop.f32.mrf.mxu0
  %60 = vdwg.mxu0
  %v61 = vmax.f32 %v58, 0.0
  %vm62 = vcmask 261120
  %63 = vst.msk [vmem:[%s3] sm:$0xff] %vm62, %v61
  // Predicated region
  $region14: #{compressor2018_forward.16} parent=0 // pred_check
    _
  $region15: #{compressor2018_forward.16} parent=0 // pred_check_branch
    %65 = sbr.rel (0) target = $region17
  $region16: #{compressor2018_forward.16} parent=0 // pred_region
    _
  $region17: #{compressor2018_forward.16} parent=0 // pred_fallthru
    _
  // Predicated region
  $region18: #{compressor2018_forward.16} parent=0 // pred_check
    _
  $region19: #{compressor2018_forward.16} parent=0 // pred_check_branch
    %67 = sbr.rel (0) target = $region21
  $region20: #{compressor2018_forward.16} parent=0 // pred_region
    _
  $region21: #{compressor2018_forward.16} parent=0 // pred_fallthru
    _

// kernel: compressor2018_forward.18
$region0: #{compressor2018_forward.18}
  #allocation0 [shape = 'u32[]', space=smem, size = 0x4, offset = 0x4, fixed_abs, tag = 'smem constant byte address 0x4 - core index']
  #allocation1 [shape = 'u32[72,128]{1,0:T(1,128)}', space=vmem, size = 0x9000, scoped, tag = 'internal scratch']
  %s0 = inlined_call_operand.vmem [shape: f32[8,128], index: 0, kind: input, shape index: {}]
  %s1 = inlined_call_operand.vmem [shape: f32[8,128], index: 1, kind: input, shape index: {}]
  %s2 = inlined_call_operand.vmem [shape: f32[8,128], index: 2, kind: input, shape index: {}]
  %s3 = inlined_call_operand.vmem [shape: f32[8,128], index: 3, kind: input, shape index: {}]
  %s4 = inlined_call_operand.vmem [shape: f32[8,128], index: 4, kind: output, shape index: {0}]
  %s5 = inlined_call_operand.hbm [shape: f32[1,1], index: 5, kind: output, shape index: {1}]
  %6 = xla_tuple %s4, %s5
  %s7 = sld [smem:[#allocation0]]
  $region34: #{compressor2018_forward.18} parent=0
    _
  %s9 = ssub.s32 1, %s7
  %s10 = scalar_select 0, %s9, %s7
  $region1: #{compressor2018_forward.18} parent=0
    #allocation2 [shape = 'u8[512]{0}', space=smem, size = 0x200, scoped, tag = 'output window, operand 1, single buffered']
    #allocation3 [shape = 's32[1]{0}', space=sflag, size = 0x4, scoped, tag = 'scoped memory for compressor2018_forward.18']
    %11 = vsyncpa [#allocation3], 0
    // Predicated region
    $region2: #{compressor2018_forward.18} parent=1 // pred_check
      _
    $region3: #{compressor2018_forward.18} parent=1 // pred_check_branch
      %13 = sbr.rel (0) target = $region5
    $region4: #{compressor2018_forward.18} parent=1 // pred_region
      _
    $region5: #{compressor2018_forward.18} parent=1 // pred_fallthru
      _
    // Predicated region
    $region6: #{compressor2018_forward.18} parent=1 // pred_check
      _
    $region7: #{compressor2018_forward.18} parent=1 // pred_check_branch
      %15 = sbr.rel (0) target = $region9
    $region8: #{compressor2018_forward.18} parent=1 // pred_region
      _
    $region9: #{compressor2018_forward.18} parent=1 // pred_fallthru
      _
    // Predicated region
    $region10: #{compressor2018_forward.18} parent=1 // pred_check
      _
    $region11: #{compressor2018_forward.18} parent=1 // pred_check_branch
      %17 = sbr.rel (0) target = $region13
    $region12: #{compressor2018_forward.18} parent=1 // pred_region
      _
    $region13: #{compressor2018_forward.18} parent=1 // pred_fallthru
      _
    // Predicated region
    $region14: #{compressor2018_forward.18} parent=1 // pred_check
      _
    $region15: #{compressor2018_forward.18} parent=1 // pred_check_branch
      %19 = sbr.rel (0) target = $region17
    $region16: #{compressor2018_forward.18} parent=1 // pred_region
      _
    $region17: #{compressor2018_forward.18} parent=1 // pred_fallthru
      _
    %v20 = vld [vmem:[%s0] sm:$0xff]
    %v21 = vld [vmem:[%s1] sm:$0xff]
    %v22 = vadd.f32 %v20, %v21
    %23 = vst [vmem:[%s4] sm:$0xff] %v22
    %v24 = vld [vmem:[%s2] sm:$0xff]
    %v25 = vmax.f32 %v24, 0.11
    %v26 = vrcp.pop %v25
    %v27 = vadd.f32 %v22, 0.5
    %v28 = vmul.f32 %v27, %v26
    %v29 = vmul.f32 %v28, 0.044715
    %v30 = vmul.f32 %v29, %v28
    %v31 = vmul.f32 %v30, %v28
    %v32 = vadd.f32 %v28, %v31
    %v33 = vmul.f32 %v32, 0.7978846
    %v34 = vtanh.pop %v33
    %v35 = vadd.f32 %v34, 1.0
    %v36 = vmul.f32 %v35, 0.5
    %v37 = vsub.f32 %v22, 0.5
    %v38 = vmul.f32 %v37, %v26
    %v39 = vmul.f32 %v38, 0.044715
    %v40 = vmul.f32 %v39, %v38
    %v41 = vmul.f32 %v40, %v38
    %v42 = vadd.f32 %v38, %v41
    %v43 = vmul.f32 %v42, 0.7978846
    %v44 = vtanh.pop %v43
    %v45 = vadd.f32 %v44, 1.0
    %v46 = vmul.f32 %v45, 0.5
    %v47 = vsub.f32 %v36, %v46
    %v48 = vmax.f32 %v47, 1e-09
    %v49 = vlog2.pop %v48
    %v50 = vmul.f32 %v49, 0.6931472
    %v51 = vsub.f32 0.0, %v50
    %v52 = vld [vmem:[%s3] sm:$0xff]
    %v53 = vmul.f32 %v51, %v52
    %54 = vadd.xlane.f32.xlu0 %v53
    %v55 = vpop.xlane.xlu0 %54
    %v56 = vrot.slane %v55, 4
    %v57 = vadd.f32 %v55, %v56
    %v58 = vrot.slane %v57, 2
    %v59 = vadd.f32 %v57, %v58
    %v60 = vrot.slane %v59, 1
    %v61 = vadd.f32 %v59, %v60
    %s62 = vtos %v61
    %s63 = smul.f32 %s62, 1.442695
    %s64 = scalar_lea.smem [#allocation2], 0
    %65 = sst [smem:[%s64]] %s63
    // Predicated region
    $region18: #{compressor2018_forward.18} parent=1 // pred_check
      _
    $region19: #{compressor2018_forward.18} parent=1 // pred_check_branch
      %67 = sbr.rel (0) target = $region21
    $region20: #{compressor2018_forward.18} parent=1 // pred_region
      _
    $region21: #{compressor2018_forward.18} parent=1 // pred_fallthru
      _
    // Predicated region
    $region22: #{compressor2018_forward.18} parent=1 // pred_check
      _
    $region23: #{compressor2018_forward.18} parent=1 // pred_check_branch
      %69 = sbr.rel (0) target = $region25
    $region24: #{compressor2018_forward.18} parent=1 // pred_region
      %71 = vsyncadd [#allocation3], 0
      %s73 = sshll.u32 %s5, 4
      %s74 = int_to_ptr.hbm [resolvable:$true] %s73
      %76 = dma.smem_to_hbm [#allocation2], 16, %s74, [#allocation3]
    $region25: #{compressor2018_forward.18} parent=1 // pred_fallthru
      _
    // Predicated region
    $region26: #{compressor2018_forward.18} parent=1 // pred_check
      _
    $region27: #{compressor2018_forward.18} parent=1 // pred_check_branch
      %78 = sbr.rel (0) target = $region29
    $region28: #{compressor2018_forward.18} parent=1 // pred_region
      _
    $region29: #{compressor2018_forward.18} parent=1 // pred_fallthru
      _
    // Predicated region
    $region30: #{compressor2018_forward.18} parent=1 // pred_check
      _
    $region31: #{compressor2018_forward.18} parent=1 // pred_check_branch
      %80 = sbr.rel (0) target = $region33
    $region32: #{compressor2018_forward.18} parent=1 // pred_region
      %82 = dma.done [#allocation3], 16
    $region33: #{compressor2018_forward.18} parent=1 // pred_fallthru
      _
    %83 = sfence
    %84 = vsyncpa [#allocation3], 1

// kernel: compressor2018_forward.17
$region0: #{compressor2018_forward.17}
  #allocation0 [shape = 'u32[]', space=smem, size = 0x4, offset = 0x4, fixed_abs, tag = 'smem constant byte address 0x4 - core index']
  #allocation1 [shape = 'u32[72,128]{1,0:T(1,128)}', space=vmem, size = 0x9000, scoped, tag = 'internal scratch']
  %s0 = inlined_call_operand.vmem [shape: bf16[32,72], index: 0, kind: input, shape index: {}]
  %s1 = inlined_call_operand.vmem [shape: bf16[72,8], index: 1, kind: input, shape index: {}]
  %s2 = inlined_call_operand.vmem [shape: f32[1,8], index: 2, kind: input, shape index: {}]
  %s3 = inlined_call_operand.vmem [shape: f32[32,8], index: 3, kind: output, shape index: {}]
  %s4 = sld [smem:[#allocation0]]
  $region22: #{compressor2018_forward.17} parent=0
    _
  %s6 = ssub.s32 1, %s4
  %s7 = scalar_select 0, %s6, %s4
  // Predicated region
  $region2: #{compressor2018_forward.17} parent=0 // pred_check
    _
  $region3: #{compressor2018_forward.17} parent=0 // pred_check_branch
    %9 = sbr.rel (0) target = $region5
  $region4: #{compressor2018_forward.17} parent=0 // pred_region
    _
  $region5: #{compressor2018_forward.17} parent=0 // pred_fallthru
    _
  // Predicated region
  $region6: #{compressor2018_forward.17} parent=0 // pred_check
    _
  $region7: #{compressor2018_forward.17} parent=0 // pred_check_branch
    %11 = sbr.rel (0) target = $region9
  $region8: #{compressor2018_forward.17} parent=0 // pred_region
    _
  $region9: #{compressor2018_forward.17} parent=0 // pred_fallthru
    _
  // Predicated region
  $region10: #{compressor2018_forward.17} parent=0 // pred_check
    _
  $region11: #{compressor2018_forward.17} parent=0 // pred_check_branch
    %13 = sbr.rel (0) target = $region13
  $region12: #{compressor2018_forward.17} parent=0 // pred_region
    _
  $region13: #{compressor2018_forward.17} parent=0 // pred_fallthru
    _
  %v15 = vld [vmem:[%s0] sm:$0xf]
  %v16 = vld [vmem:[%s0 + $0x4] sm:$0xf]
  %v17 = vld [vmem:[%s0 + $0x8] sm:$0xf]
  %v18 = vld [vmem:[%s0 + $0xc] sm:$0xf]
  %v19 = vld [vmem:[%s1] sm:$0xf]
  %v20 = vld [vmem:[%s1 + $0x4] sm:$0xf]
  %v21 = vld [vmem:[%s1 + $0x8] sm:$0xf]
  %v22 = vld [vmem:[%s1 + $0xc] sm:$0xf]
  %v23 = vld [vmem:[%s1 + $0x10] sm:$0xf]
  %v24 = vld [vmem:[%s1 + $0x14] sm:$0xf]
  %v25 = vld [vmem:[%s1 + $0x18] sm:$0xf]
  %v26 = vld [vmem:[%s1 + $0x1c] sm:$0xf]
  %v27 = vld [vmem:[%s1 + $0x20] sm:$0xf]
  %v28 = vld [vmem:[%s2] sm:$0x1]
  %v30 = vperm.slane %v28, 0
  %v36 = vunpack.c.l.b16 %v15
  %v37 = vunpack.c.l.b16 %v16
  %v38 = vunpack.c.l.b16 %v17
  %v39 = vunpack.c.l.b16 %v18
  %v40 = vpack.c.b16 %v37, %v36
  %v41 = vpack.c.b16 %v39, %v38
  %v51 = vunpack.c.l.b16 %v19
  %v52 = vunpack.c.l.b16 %v20
  %v53 = vunpack.c.l.b16 %v21
  %v54 = vunpack.c.l.b16 %v22
  %v55 = vunpack.c.l.b16 %v23
  %v56 = vunpack.c.l.b16 %v24
  %v57 = vunpack.c.l.b16 %v25
  %v58 = vunpack.c.l.b16 %v26
  %v59 = vunpack.c.l.b16 %v27
  %v60 = vpack.c.b16 %v52, %v51
  %v61 = vpack.c.b16 %v54, %v53
  %v62 = vpack.c.b16 %v56, %v55
  %v63 = vpack.c.b16 %v58, %v57
  %v64 = vpack.c.b16 %v59, %v59
  %vm69 = vcmask 588800
  %v71 = vsel %vm69, %v40, 0
  %v74 = vsel %vm69, %v41, 0
  %vm76 = vcmask 1043456
  %v78 = vsel %vm76, %v64, 0
  %80 = vmatpush.bf16.msra.mxu0 0
  %81 = vmatpush.bf16.msra.mxu0 0
  %82 = vmatpush.bf16.msra.mxu0 0
  %83 = vmatpush.bf16.msra.mxu0 %v78
  %84 = vmatpush.bf16.msra.mxu0 %v63
  %85 = vmatpush.bf16.msra.mxu0 %v62
  %86 = vmatpush.bf16.msra.mxu0 %v61
  %87 = vmatpush.bf16.msra.mxu0 %v60
  %88 = vmatmul.bf16.gmra.mxu0 %v71
  %v89 = vpop.f32.mrf.mxu0
  %v90 = vadd.f32 %v30, %v89
  %v91 = vpop.f32.mrf.mxu0
  %v92 = vadd.f32 %v30, %v91
  %93 = vmatmul.bf16.gmra.mxu0 %v74
  %v94 = vpop.f32.mrf.mxu0
  %v95 = vadd.f32 %v30, %v94
  %v96 = vpop.f32.mrf.mxu0
  %v97 = vadd.f32 %v30, %v96
  %98 = vdwg.mxu0
  %vm99 = vcmask 64512
  %100 = vst.msk [vmem:[%s3] sm:$0xff] %vm99, %v90
  %101 = vst.msk [vmem:[%s3 + $0x8] sm:$0xff] %vm99, %v92
  %102 = vst.msk [vmem:[%s3 + $0x10] sm:$0xff] %vm99, %v95
  %103 = vst.msk [vmem:[%s3 + $0x18] sm:$0xff] %vm99, %v97
  // Predicated region
  $region14: #{compressor2018_forward.17} parent=0 // pred_check
    _
  $region15: #{compressor2018_forward.17} parent=0 // pred_check_branch
    %105 = sbr.rel (0) target = $region17
  $region16: #{compressor2018_forward.17} parent=0 // pred_region
    _
  $region17: #{compressor2018_forward.17} parent=0 // pred_fallthru
    _
  // Predicated region
  $region18: #{compressor2018_forward.17} parent=0 // pred_check
    _
  $region19: #{compressor2018_forward.17} parent=0 // pred_check_branch
    %107 = sbr.rel (0) target = $region21
  $region20: #{compressor2018_forward.17} parent=0 // pred_region
    _
  $region21: #{compressor2018_forward.17} parent=0 // pred_fallthru
    _

// kernel: compressor2018_forward.19
$region0: #{compressor2018_forward.19}
  #allocation0 [shape = 'u32[]', space=smem, size = 0x4, offset = 0x4, fixed_abs, tag = 'smem constant byte address 0x4 - core index']
  #allocation1 [shape = 'u32[72,128]{1,0:T(1,128)}', space=vmem, size = 0x9000, scoped, tag = 'internal scratch']
  %s0 = inlined_call_operand.vmem [shape: bf16[32,72], index: 0, kind: input, shape index: {}]
  %s1 = inlined_call_operand.vmem [shape: bf16[72,32], index: 1, kind: input, shape index: {}]
  %s2 = inlined_call_operand.vmem [shape: f32[1,32], index: 2, kind: input, shape index: {}]
  %s3 = inlined_call_operand.vmem [shape: f32[32,32], index: 3, kind: input, shape index: {}]
  %s4 = inlined_call_operand.vmem [shape: f32[1,32], index: 4, kind: input, shape index: {}]
  %s5 = inlined_call_operand.vmem [shape: f32[32,32], index: 5, kind: output, shape index: {}]
  %s6 = sld [smem:[#allocation0]]
  $region30: #{compressor2018_forward.19} parent=0
    _
  %s8 = ssub.s32 1, %s6
  %s9 = scalar_select 0, %s8, %s6
  // Predicated region
  $region2: #{compressor2018_forward.19} parent=0 // pred_check
    _
  $region3: #{compressor2018_forward.19} parent=0 // pred_check_branch
    %11 = sbr.rel (0) target = $region5
  $region4: #{compressor2018_forward.19} parent=0 // pred_region
    _
  $region5: #{compressor2018_forward.19} parent=0 // pred_fallthru
    _
  // Predicated region
  $region6: #{compressor2018_forward.19} parent=0 // pred_check
    _
  $region7: #{compressor2018_forward.19} parent=0 // pred_check_branch
    %13 = sbr.rel (0) target = $region9
  $region8: #{compressor2018_forward.19} parent=0 // pred_region
    _
  $region9: #{compressor2018_forward.19} parent=0 // pred_fallthru
    _
  // Predicated region
  $region10: #{compressor2018_forward.19} parent=0 // pred_check
    _
  $region11: #{compressor2018_forward.19} parent=0 // pred_check_branch
    %15 = sbr.rel (0) target = $region13
  $region12: #{compressor2018_forward.19} parent=0 // pred_region
    _
  $region13: #{compressor2018_forward.19} parent=0 // pred_fallthru
    _
  // Predicated region
  $region14: #{compressor2018_forward.19} parent=0 // pred_check
    _
  $region15: #{compressor2018_forward.19} parent=0 // pred_check_branch
    %17 = sbr.rel (0) target = $region17
  $region16: #{compressor2018_forward.19} parent=0 // pred_region
    _
  $region17: #{compressor2018_forward.19} parent=0 // pred_fallthru
    _
  // Predicated region
  $region18: #{compressor2018_forward.19} parent=0 // pred_check
    _
  $region19: #{compressor2018_forward.19} parent=0 // pred_check_branch
    %19 = sbr.rel (0) target = $region21
  $region20: #{compressor2018_forward.19} parent=0 // pred_region
    _
  $region21: #{compressor2018_forward.19} parent=0 // pred_fallthru
    _
  %v21 = vld [vmem:[%s0] sm:$0xf]
  %v22 = vld [vmem:[%s0 + $0x4] sm:$0xf]
  %v23 = vld [vmem:[%s0 + $0x8] sm:$0xf]
  %v24 = vld [vmem:[%s0 + $0xc] sm:$0xf]
  %v25 = vld [vmem:[%s1] sm:$0xf]
  %v26 = vld [vmem:[%s1 + $0x4] sm:$0xf]
  %v27 = vld [vmem:[%s1 + $0x8] sm:$0xf]
  %v28 = vld [vmem:[%s1 + $0xc] sm:$0xf]
  %v29 = vld [vmem:[%s1 + $0x10] sm:$0xf]
  %v30 = vld [vmem:[%s1 + $0x14] sm:$0xf]
  %v31 = vld [vmem:[%s1 + $0x18] sm:$0xf]
  %v32 = vld [vmem:[%s1 + $0x1c] sm:$0xf]
  %v33 = vld [vmem:[%s1 + $0x20] sm:$0xf]
  %v34 = vld [vmem:[%s2] sm:$0x1]
  %v36 = vperm.slane %v34, 0
  %v42 = vunpack.c.l.b16 %v21
  %v43 = vunpack.c.l.b16 %v22
  %v44 = vunpack.c.l.b16 %v23
  %v45 = vunpack.c.l.b16 %v24
  %v46 = vpack.c.b16 %v43, %v42
  %v47 = vpack.c.b16 %v45, %v44
  %v57 = vunpack.c.l.b16 %v25
  %v58 = vunpack.c.l.b16 %v26
  %v59 = vunpack.c.l.b16 %v27
  %v60 = vunpack.c.l.b16 %v28
  %v61 = vunpack.c.l.b16 %v29
  %v62 = vunpack.c.l.b16 %v30
  %v63 = vunpack.c.l.b16 %v31
  %v64 = vunpack.c.l.b16 %v32
  %v65 = vunpack.c.l.b16 %v33
  %v66 = vpack.c.b16 %v58, %v57
  %v67 = vpack.c.b16 %v60, %v59
  %v68 = vpack.c.b16 %v62, %v61
  %v69 = vpack.c.b16 %v64, %v63
  %v70 = vpack.c.b16 %v65, %v65
  %vm75 = vcmask 588800
  %v77 = vsel %vm75, %v46, 0
  %v80 = vsel %vm75, %v47, 0
  %vm82 = vcmask 1043456
  %v84 = vsel %vm82, %v70, 0
  %86 = vmatpush.bf16.msra.mxu0 0
  %87 = vmatpush.bf16.msra.mxu0 0
  %88 = vmatpush.bf16.msra.mxu0 0
  %89 = vmatpush.bf16.msra.mxu0 %v84
  %90 = vmatpush.bf16.msra.mxu0 %v69
  %91 = vmatpush.bf16.msra.mxu0 %v68
  %92 = vmatpush.bf16.msra.mxu0 %v67
  %93 = vmatpush.bf16.msra.mxu0 %v66
  %94 = vmatmul.bf16.gmra.mxu0 %v77
  %v95 = vpop.f32.mrf.mxu0
  %v96 = vadd.f32 %v36, %v95
  %v97 = vpop.f32.mrf.mxu0
  %v98 = vadd.f32 %v36, %v97
  %99 = vmatmul.bf16.gmra.mxu0 %v80
  %v100 = vpop.f32.mrf.mxu0
  %v101 = vadd.f32 %v36, %v100
  %v102 = vpop.f32.mrf.mxu0
  %v103 = vadd.f32 %v36, %v102
  %104 = vdwg.mxu0
  %v105 = vmul.f32 %v96, %v96
  %v106 = vmul.f32 %v98, %v98
  %v107 = vmul.f32 %v101, %v101
  %v108 = vmul.f32 %v103, %v103
  %v109 = vld [vmem:[%s3] sm:$0xff]
  %v110 = vld [vmem:[%s3 + $0x8] sm:$0xff]
  %v111 = vld [vmem:[%s3 + $0x10] sm:$0xff]
  %v112 = vld [vmem:[%s3 + $0x18] sm:$0xff]
  %v113 = vld [vmem:[%s4] sm:$0x1]
  %v115 = vperm.slane %v113, 0
  %vm117 = vcmask 261120
  %v119 = vsel %vm117, %v105, 0
  %v122 = vsel %vm117, %v106, 0
  %v125 = vsel %vm117, %v107, 0
  %v128 = vsel %vm117, %v108, 0
  %130 = vmatpush.msra.mxu0 0.0
  %131 = vmatpush.msra.mxu0 0.0
  %132 = vmatpush.msra.mxu0 0.0
  %133 = vmatpush.msra.mxu0 0.0
  %134 = vmatpush.msra.mxu0 0.0
  %135 = vmatpush.msra.mxu0 0.0
  %136 = vmatpush.msra.mxu0 0.0
  %137 = vmatpush.msra.mxu0 0.0
  %138 = vmatpush.msra.mxu0 0.0
  %139 = vmatpush.msra.mxu0 0.0
  %140 = vmatpush.msra.mxu0 0.0
  %141 = vmatpush.msra.mxu0 0.0
  %142 = vmatpush.msra.mxu0 %v112
  %143 = vmatpush.msra.mxu0 %v111
  %144 = vmatpush.msra.mxu0 %v110
  %145 = vmatpush.msra.mxu0 %v109
  %146 = vmatmul.f32.gmra.mxu0 %v119
  %v147 = vpop.f32.mrf.mxu0
  %v148 = vadd.f32 %v115, %v147
  %149 = vmatmul.f32.gmra.mxu0 %v122
  %v150 = vpop.f32.mrf.mxu0
  %v151 = vadd.f32 %v115, %v150
  %152 = vmatmul.f32.gmra.mxu0 %v125
  %v153 = vpop.f32.mrf.mxu0
  %v154 = vadd.f32 %v115, %v153
  %155 = vmatmul.f32.gmra.mxu0 %v128
  %v156 = vpop.f32.mrf.mxu0
  %v157 = vadd.f32 %v115, %v156
  %158 = vdwg.mxu0
  %v159 = vrsqrt.pop %v148
  %v160 = vmul.f32 %v159, %v148
  %v161 = vmul.f32 %v160, %v159
  %v162 = vmul.f32 0.5, %v161
  %v163 = vsub.f32 1.5, %v162
  %v164 = vmul.f32 %v159, %v163
  %v165 = vmul.f32 %v148, %v164
  %vm166 = vcmp.eq.f32.partialorder %v148, inf
  %v167 = vsel %vm166, %v148, %v165
  %vm168 = vcmp.eq.f32.partialorder %v148, 0.0
  %v169 = vand.u32 %v148, 2147483648
  %v170 = vsel %vm168, %v169, %v167
  %v171 = vrsqrt.pop %v151
  %v172 = vmul.f32 %v171, %v151
  %v173 = vmul.f32 %v172, %v171
  %v174 = vmul.f32 0.5, %v173
  %v175 = vsub.f32 1.5, %v174
  %v176 = vmul.f32 %v171, %v175
  %v177 = vmul.f32 %v151, %v176
  %vm178 = vcmp.eq.f32.partialorder %v151, inf
  %v179 = vsel %vm178, %v151, %v177
  %vm180 = vcmp.eq.f32.partialorder %v151, 0.0
  %v181 = vand.u32 %v151, 2147483648
  %v182 = vsel %vm180, %v181, %v179
  %v183 = vrsqrt.pop %v154
  %v184 = vmul.f32 %v183, %v154
  %v185 = vmul.f32 %v184, %v183
  %v186 = vmul.f32 0.5, %v185
  %v187 = vsub.f32 1.5, %v186
  %v188 = vmul.f32 %v183, %v187
  %v189 = vmul.f32 %v154, %v188
  %vm190 = vcmp.eq.f32.partialorder %v154, inf
  %v191 = vsel %vm190, %v154, %v189
  %vm192 = vcmp.eq.f32.partialorder %v154, 0.0
  %v193 = vand.u32 %v154, 2147483648
  %v194 = vsel %vm192, %v193, %v191
  %v195 = vrsqrt.pop %v157
  %v196 = vmul.f32 %v195, %v157
  %v197 = vmul.f32 %v196, %v195
  %v198 = vmul.f32 0.5, %v197
  %v199 = vsub.f32 1.5, %v198
  %v200 = vmul.f32 %v195, %v199
  %v201 = vmul.f32 %v157, %v200
  %vm202 = vcmp.eq.f32.partialorder %v157, inf
  %v203 = vsel %vm202, %v157, %v201
  %vm204 = vcmp.eq.f32.partialorder %v157, 0.0
  %v205 = vand.u32 %v157, 2147483648
  %v206 = vsel %vm204, %v205, %v203
  %v207 = vmul.f32 %v96, %v170
  %v208 = vmul.f32 %v98, %v182
  %v209 = vmul.f32 %v101, %v194
  %v210 = vmul.f32 %v103, %v206
  %211 = vst.msk [vmem:[%s5] sm:$0xff] %vm117, %v207
  %212 = vst.msk [vmem:[%s5 + $0x8] sm:$0xff] %vm117, %v208
  %213 = vst.msk [vmem:[%s5 + $0x10] sm:$0xff] %vm117, %v209
  %214 = vst.msk [vmem:[%s5 + $0x18] sm:$0xff] %vm117, %v210
  // Predicated region
  $region22: #{compressor2018_forward.19} parent=0 // pred_check
    _
  $region23: #{compressor2018_forward.19} parent=0 // pred_check_branch
    %216 = sbr.rel (0) target = $region25
  $region24: #{compressor2018_forward.19} parent=0 // pred_region
    _
  $region25: #{compressor2018_forward.19} parent=0 // pred_fallthru
    _
  // Predicated region
  $region26: #{compressor2018_forward.19} parent=0 // pred_check
    _
  $region27: #{compressor2018_forward.19} parent=0 // pred_check_branch
    %218 = sbr.rel (0) target = $region29
  $region28: #{compressor2018_forward.19} parent=0 // pred_region
    _
  $region29: #{compressor2018_forward.19} parent=0 // pred_fallthru
    _

// kernel: compressor2018_forward.20
$region0: #{compressor2018_forward.20}
  #allocation0 [shape = 'u32[]', space=smem, size = 0x4, offset = 0x4, fixed_abs, tag = 'smem constant byte address 0x4 - core index']
  #allocation1 [shape = 'u32[72,128]{1,0:T(1,128)}', space=vmem, size = 0x9000, scoped, tag = 'internal scratch']
  %s0 = inlined_call_operand.vmem [shape: bf16[128,72], index: 0, kind: input, shape index: {}]
  %s1 = inlined_call_operand.vmem [shape: bf16[72,12], index: 1, kind: input, shape index: {}]
  %s2 = inlined_call_operand.vmem [shape: f32[1,12], index: 2, kind: input, shape index: {}]
  %s3 = inlined_call_operand.vmem [shape: f32[128,12], index: 3, kind: output, shape index: {}]
  %s4 = sld [smem:[#allocation0]]
  $region22: #{compressor2018_forward.20} parent=0
    _
  %s6 = ssub.s32 1, %s4
  %s7 = scalar_select 0, %s6, %s4
  // Predicated region
  $region2: #{compressor2018_forward.20} parent=0 // pred_check
    _
  $region3: #{compressor2018_forward.20} parent=0 // pred_check_branch
    %9 = sbr.rel (0) target = $region5
  $region4: #{compressor2018_forward.20} parent=0 // pred_region
    _
  $region5: #{compressor2018_forward.20} parent=0 // pred_fallthru
    _
  // Predicated region
  $region6: #{compressor2018_forward.20} parent=0 // pred_check
    _
  $region7: #{compressor2018_forward.20} parent=0 // pred_check_branch
    %11 = sbr.rel (0) target = $region9
  $region8: #{compressor2018_forward.20} parent=0 // pred_region
    _
  $region9: #{compressor2018_forward.20} parent=0 // pred_fallthru
    _
  // Predicated region
  $region10: #{compressor2018_forward.20} parent=0 // pred_check
    _
  $region11: #{compressor2018_forward.20} parent=0 // pred_check_branch
    %13 = sbr.rel (0) target = $region13
  $region12: #{compressor2018_forward.20} parent=0 // pred_region
    _
  $region13: #{compressor2018_forward.20} parent=0 // pred_fallthru
    _
  %v15 = vld [vmem:[%s0] sm:$0xf]
  %v16 = vld [vmem:[%s0 + $0x4] sm:$0xf]
  %v17 = vld [vmem:[%s0 + $0x8] sm:$0xf]
  %v18 = vld [vmem:[%s0 + $0xc] sm:$0xf]
  %v19 = vld [vmem:[%s0 + $0x10] sm:$0xf]
  %v20 = vld [vmem:[%s0 + $0x14] sm:$0xf]
  %v21 = vld [vmem:[%s0 + $0x18] sm:$0xf]
  %v22 = vld [vmem:[%s0 + $0x1c] sm:$0xf]
  %v23 = vld [vmem:[%s0 + $0x20] sm:$0xf]
  %v24 = vld [vmem:[%s0 + $0x24] sm:$0xf]
  %v25 = vld [vmem:[%s0 + $0x28] sm:$0xf]
  %v26 = vld [vmem:[%s0 + $0x2c] sm:$0xf]
  %v27 = vld [vmem:[%s0 + $0x30] sm:$0xf]
  %v28 = vld [vmem:[%s0 + $0x34] sm:$0xf]
  %v29 = vld [vmem:[%s0 + $0x38] sm:$0xf]
  %v30 = vld [vmem:[%s0 + $0x3c] sm:$0xf]
  %v31 = vld [vmem:[%s1] sm:$0xf]
  %v32 = vld [vmem:[%s1 + $0x4] sm:$0xf]
  %v33 = vld [vmem:[%s1 + $0x8] sm:$0xf]
  %v34 = vld [vmem:[%s1 + $0xc] sm:$0xf]
  %v35 = vld [vmem:[%s1 + $0x10] sm:$0xf]
  %v36 = vld [vmem:[%s1 + $0x14] sm:$0xf]
  %v37 = vld [vmem:[%s1 + $0x18] sm:$0xf]
  %v38 = vld [vmem:[%s1 + $0x1c] sm:$0xf]
  %v39 = vld [vmem:[%s1 + $0x20] sm:$0xf]
  %v40 = vld [vmem:[%s2] sm:$0x1]
  %v42 = vperm.slane %v40, 0
  %v60 = vunpack.c.l.b16 %v15
  %v61 = vunpack.c.l.b16 %v16
  %v62 = vunpack.c.l.b16 %v17
  %v63 = vunpack.c.l.b16 %v18
  %v64 = vunpack.c.l.b16 %v19
  %v65 = vunpack.c.l.b16 %v20
  %v66 = vunpack.c.l.b16 %v21
  %v67 = vunpack.c.l.b16 %v22
  %v68 = vunpack.c.l.b16 %v23
  %v69 = vunpack.c.l.b16 %v24
  %v70 = vunpack.c.l.b16 %v25
  %v71 = vunpack.c.l.b16 %v26
  %v72 = vunpack.c.l.b16 %v27
  %v73 = vunpack.c.l.b16 %v28
  %v74 = vunpack.c.l.b16 %v29
  %v75 = vunpack.c.l.b16 %v30
  %v76 = vpack.c.b16 %v61, %v60
  %v77 = vpack.c.b16 %v63, %v62
  %v78 = vpack.c.b16 %v65, %v64
  %v79 = vpack.c.b16 %v67, %v66
  %v80 = vpack.c.b16 %v69, %v68
  %v81 = vpack.c.b16 %v71, %v70
  %v82 = vpack.c.b16 %v73, %v72
  %v83 = vpack.c.b16 %v75, %v74
  %v93 = vunpack.c.l.b16 %v31
  %v94 = vunpack.c.l.b16 %v32
  %v95 = vunpack.c.l.b16 %v33
  %v96 = vunpack.c.l.b16 %v34
  %v97 = vunpack.c.l.b16 %v35
  %v98 = vunpack.c.l.b16 %v36
  %v99 = vunpack.c.l.b16 %v37
  %v100 = vunpack.c.l.b16 %v38
  %v101 = vunpack.c.l.b16 %v39
  %v102 = vpack.c.b16 %v94, %v93
  %v103 = vpack.c.b16 %v96, %v95
  %v104 = vpack.c.b16 %v98, %v97
  %v105 = vpack.c.b16 %v100, %v99
  %v106 = vpack.c.b16 %v101, %v101
  %vm111 = vcmask 588800
  %v113 = vsel %vm111, %v76, 0
  %v116 = vsel %vm111, %v77, 0
  %v119 = vsel %vm111, %v78, 0
  %v122 = vsel %vm111, %v79, 0
  %v125 = vsel %vm111, %v80, 0
  %v128 = vsel %vm111, %v81, 0
  %v131 = vsel %vm111, %v82, 0
  %v134 = vsel %vm111, %v83, 0
  %vm136 = vcmask 1043456
  %v138 = vsel %vm136, %v106, 0
  %140 = vmatpush.bf16.msra.mxu0 0
  %141 = vmatpush.bf16.msra.mxu0 0
  %142 = vmatpush.bf16.msra.mxu0 0
  %143 = vmatpush.bf16.msra.mxu0 %v138
  %144 = vmatpush.bf16.msra.mxu0 %v105
  %145 = vmatpush.bf16.msra.mxu0 %v104
  %146 = vmatpush.bf16.msra.mxu0 %v103
  %147 = vmatpush.bf16.msra.mxu0 %v102
  %148 = vmatmul.bf16.gmra.mxu0 %v113
  %v149 = vpop.f32.mrf.mxu0
  %v150 = vadd.f32 %v42, %v149
  %v151 = vpop.f32.mrf.mxu0
  %v152 = vadd.f32 %v42, %v151
  %153 = vmatmul.bf16.gmra.mxu0 %v116
  %v154 = vpop.f32.mrf.mxu0
  %v155 = vadd.f32 %v42, %v154
  %v156 = vpop.f32.mrf.mxu0
  %v157 = vadd.f32 %v42, %v156
  %158 = vmatmul.bf16.gmra.mxu0 %v119
  %v159 = vpop.f32.mrf.mxu0
  %v160 = vadd.f32 %v42, %v159
  %v161 = vpop.f32.mrf.mxu0
  %v162 = vadd.f32 %v42, %v161
  %163 = vmatmul.bf16.gmra.mxu0 %v122
  %v164 = vpop.f32.mrf.mxu0
  %v165 = vadd.f32 %v42, %v164
  %v166 = vpop.f32.mrf.mxu0
  %v167 = vadd.f32 %v42, %v166
  %168 = vmatmul.bf16.gmra.mxu0 %v125
  %v169 = vpop.f32.mrf.mxu0
  %v170 = vadd.f32 %v42, %v169
  %v171 = vpop.f32.mrf.mxu0
  %v172 = vadd.f32 %v42, %v171
  %173 = vmatmul.bf16.gmra.mxu0 %v128
  %v174 = vpop.f32.mrf.mxu0
  %v175 = vadd.f32 %v42, %v174
  %v176 = vpop.f32.mrf.mxu0
  %v177 = vadd.f32 %v42, %v176
  %178 = vmatmul.bf16.gmra.mxu0 %v131
  %v179 = vpop.f32.mrf.mxu0
  %v180 = vadd.f32 %v42, %v179
  %v181 = vpop.f32.mrf.mxu0
  %v182 = vadd.f32 %v42, %v181
  %183 = vmatmul.bf16.gmra.mxu0 %v134
  %v184 = vpop.f32.mrf.mxu0
  %v185 = vadd.f32 %v42, %v184
  %v186 = vpop.f32.mrf.mxu0
  %v187 = vadd.f32 %v42, %v186
  %188 = vdwg.mxu0
  %vm189 = vcmask 97280
  %190 = vst.msk [vmem:[%s3] sm:$0xff] %vm189, %v150
  %191 = vst.msk [vmem:[%s3 + $0x8] sm:$0xff] %vm189, %v152
  %192 = vst.msk [vmem:[%s3 + $0x10] sm:$0xff] %vm189, %v155
  %193 = vst.msk [vmem:[%s3 + $0x18] sm:$0xff] %vm189, %v157
  %194 = vst.msk [vmem:[%s3 + $0x20] sm:$0xff] %vm189, %v160
  %195 = vst.msk [vmem:[%s3 + $0x28] sm:$0xff] %vm189, %v162
  %196 = vst.msk [vmem:[%s3 + $0x30] sm:$0xff] %vm189, %v165
  %197 = vst.msk [vmem:[%s3 + $0x38] sm:$0xff] %vm189, %v167
  %198 = vst.msk [vmem:[%s3 + $0x40] sm:$0xff] %vm189, %v170
  %199 = vst.msk [vmem:[%s3 + $0x48] sm:$0xff] %vm189, %v172
  %200 = vst.msk [vmem:[%s3 + $0x50] sm:$0xff] %vm189, %v175
  %201 = vst.msk [vmem:[%s3 + $0x58] sm:$0xff] %vm189, %v177
  %202 = vst.msk [vmem:[%s3 + $0x60] sm:$0xff] %vm189, %v180
  %203 = vst.msk [vmem:[%s3 + $0x68] sm:$0xff] %vm189, %v182
  %204 = vst.msk [vmem:[%s3 + $0x70] sm:$0xff] %vm189, %v185
  %205 = vst.msk [vmem:[%s3 + $0x78] sm:$0xff] %vm189, %v187
  // Predicated region
  $region14: #{compressor2018_forward.20} parent=0 // pred_check
    _
  $region15: #{compressor2018_forward.20} parent=0 // pred_check_branch
    %207 = sbr.rel (0) target = $region17
  $region16: #{compressor2018_forward.20} parent=0 // pred_region
    _
  $region17: #{compressor2018_forward.20} parent=0 // pred_fallthru
    _
  // Predicated region
  $region18: #{compressor2018_forward.20} parent=0 // pred_check
    _
  $region19: #{compressor2018_forward.20} parent=0 // pred_check_branch
    %209 = sbr.rel (0) target = $region21
  $region20: #{compressor2018_forward.20} parent=0 // pred_region
    _
  $region21: #{compressor2018_forward.20} parent=0 // pred_fallthru
    _

// kernel: compressor2018_forward.21
$region0: #{compressor2018_forward.21}
  #allocation0 [shape = 'u32[]', space=smem, size = 0x4, offset = 0x4, fixed_abs, tag = 'smem constant byte address 0x4 - core index']
  #allocation1 [shape = 'u32[72,128]{1,0:T(1,128)}', space=vmem, size = 0x9000, scoped, tag = 'internal scratch']
  %s0 = inlined_call_operand.vmem [shape: f32[16,128], index: 0, kind: input, shape index: {}]
  %s1 = inlined_call_operand.vmem [shape: f32[16,128], index: 1, kind: input, shape index: {}]
  %s2 = inlined_call_operand.vmem [shape: f32[16,128], index: 2, kind: input, shape index: {}]
  %s3 = inlined_call_operand.vmem [shape: f32[16,128], index: 3, kind: output, shape index: {0}]
  %s4 = inlined_call_operand.hbm [shape: f32[1,1], index: 4, kind: output, shape index: {1}]
  %5 = xla_tuple %s3, %s4
  %s6 = sld [smem:[#allocation0]]
  $region30: #{compressor2018_forward.21} parent=0
    _
  %s8 = ssub.s32 1, %s6
  %s9 = scalar_select 0, %s8, %s6
  $region1: #{compressor2018_forward.21} parent=0
    #allocation2 [shape = 'u8[512]{0}', space=smem, size = 0x200, scoped, tag = 'output window, operand 1, single buffered']
    #allocation3 [shape = 's32[1]{0}', space=sflag, size = 0x4, scoped, tag = 'scoped memory for compressor2018_forward.21']
    %10 = vsyncpa [#allocation3], 0
    // Predicated region
    $region2: #{compressor2018_forward.21} parent=1 // pred_check
      _
    $region3: #{compressor2018_forward.21} parent=1 // pred_check_branch
      %12 = sbr.rel (0) target = $region5
    $region4: #{compressor2018_forward.21} parent=1 // pred_region
      _
    $region5: #{compressor2018_forward.21} parent=1 // pred_fallthru
      _
    // Predicated region
    $region6: #{compressor2018_forward.21} parent=1 // pred_check
      _
    $region7: #{compressor2018_forward.21} parent=1 // pred_check_branch
      %14 = sbr.rel (0) target = $region9
    $region8: #{compressor2018_forward.21} parent=1 // pred_region
      _
    $region9: #{compressor2018_forward.21} parent=1 // pred_fallthru
      _
    // Predicated region
    $region10: #{compressor2018_forward.21} parent=1 // pred_check
      _
    $region11: #{compressor2018_forward.21} parent=1 // pred_check_branch
      %16 = sbr.rel (0) target = $region13
    $region12: #{compressor2018_forward.21} parent=1 // pred_region
      _
    $region13: #{compressor2018_forward.21} parent=1 // pred_fallthru
      _
    %v17 = vld [vmem:[%s0] sm:$0xff]
    %v18 = vld [vmem:[%s0 + $0x8] sm:$0xff]
    %v19 = vmax.f32 %v17, 0.0
    %v20 = vmax.f32 %v18, 0.0
    %v21 = vmin.f32 %v19, 1.0
    %v22 = vmin.f32 %v20, 1.0
    %23 = vst [vmem:[%s3] sm:$0xff] %v21
    %24 = vst [vmem:[%s3 + $0x8] sm:$0xff] %v22
    %v25 = vld [vmem:[%s1] sm:$0xff]
    %v26 = vld [vmem:[%s1 + $0x8] sm:$0xff]
    %v27 = vsub.f32 %v21, %v25
    %v28 = vsub.f32 %v22, %v26
    %v29 = vld [vmem:[%s2] sm:$0xff]
    %v30 = vld [vmem:[%s2 + $0x8] sm:$0xff]
    %v31 = vmul.f32 %v27, %v29
    %v32 = vmul.f32 %v28, %v30
    %v33 = vmul.f32 %v31, %v31
    %v34 = vmul.f32 %v32, %v32
    %v35 = vadd.f32 %v33, %v34
    %36 = vadd.xlane.f32.xlu0 %v35
    %v37 = vpop.xlane.xlu0 %36
    %v38 = vrot.slane %v37, 4
    %v39 = vadd.f32 %v37, %v38
    %v40 = vrot.slane %v39, 2
    %v41 = vadd.f32 %v39, %v40
    %v42 = vrot.slane %v41, 1
    %v43 = vadd.f32 %v41, %v42
    %s44 = vtos %v43
    %s45 = scalar_lea.smem [#allocation2], 0
    %46 = sst [smem:[%s45]] %s44
    // Predicated region
    $region14: #{compressor2018_forward.21} parent=1 // pred_check
      _
    $region15: #{compressor2018_forward.21} parent=1 // pred_check_branch
      %48 = sbr.rel (0) target = $region17
    $region16: #{compressor2018_forward.21} parent=1 // pred_region
      _
    $region17: #{compressor2018_forward.21} parent=1 // pred_fallthru
      _
    // Predicated region
    $region18: #{compressor2018_forward.21} parent=1 // pred_check
      _
    $region19: #{compressor2018_forward.21} parent=1 // pred_check_branch
      %50 = sbr.rel (0) target = $region21
    $region20: #{compressor2018_forward.21} parent=1 // pred_region
      %52 = vsyncadd [#allocation3], 0
      %s54 = sshll.u32 %s4, 4
      %s55 = int_to_ptr.hbm [resolvable:$true] %s54
      %57 = dma.smem_to_hbm [#allocation2], 16, %s55, [#allocation3]
    $region21: #{compressor2018_forward.21} parent=1 // pred_fallthru
      _
    // Predicated region
    $region22: #{compressor2018_forward.21} parent=1 // pred_check
      _
    $region23: #{compressor2018_forward.21} parent=1 // pred_check_branch
      %59 = sbr.rel (0) target = $region25
    $region24: #{compressor2018_forward.21} parent=1 // pred_region
      _
    $region25: #{compressor2018_forward.21} parent=1 // pred_fallthru
      _
    // Predicated region
    $region26: #{compressor2018_forward.21} parent=1 // pred_check
      _
    $region27: #{compressor2018_forward.21} parent=1 // pred_check_branch
      %61 = sbr.rel (0) target = $region29
    $region28: #{compressor2018_forward.21} parent=1 // pred_region
      %63 = dma.done [#allocation3], 16
    $region29: #{compressor2018_forward.21} parent=1 // pred_fallthru
      _
    %64 = sfence
    %65 = vsyncpa [#allocation3], 1

</llo_original>
